<compile_context>
chip_gen: v6e
topology: v6e:2x2x1
jax: 0.10.0
libtpu: 0.0.40
codegen_flags: <defaults>
</compile_context>

<pallas_src>
import functools

import jax
import jax.numpy as jnp
from jax import lax
from jax.experimental import pallas as pl
from jax.experimental.pallas import tpu as pltpu

K = 7        # kernel_size along H (kernel width is 1)
PAD = 3      # padding = (3, 0)
EPS = 1e-5   # BatchNorm2d eps


def _res_block_kernel(xb_ref, w1_ref, t1_ref, w2_ref, t2_ref, o_ref, *, H, L):
    """One grid step = Bt images flattened onto one row axis.

    xb_ref : (1, R, W*Cin) f32, R = Bt*L + 2*PAD.  Each image occupies L rows
             (PAD zeros | H data | PAD zeros); the block has an extra PAD-row
             zero halo top and bottom so conv1's output IS conv2's padded input.
    w*_ref : (K*W*Ci, W*Co) bf16 im2col-stacked block-diagonal taps.
    t*_ref : (1, W*Co) f32 folded conv-bias + eval-mode BN shift.
    """
    R = xb_ref.shape[1]
    M1 = R - (K - 1)            # = Bt*L : conv1 output rows == conv2 padded-input rows
    M2 = M1 - (K - 1)           # = Bt*L - 6 : conv2 output rows

    # Single f32->bf16 cast of the whole input block (hoisted out of the tap slices).
    xb16 = xb_ref[0].astype(jnp.bfloat16)                       # (R, W*Cin)

    # ---- conv1 (+ folded bias & BN1): one im2col matmul, K*W*Cin-deep contraction.
    x1 = jnp.concatenate([xb16[kh:kh + M1] for kh in range(K)], axis=1)
    acc1 = jnp.dot(x1, w1_ref[...], preferred_element_type=jnp.float32)
    f1 = jnp.maximum(acc1 + t1_ref[...], 0.0)                   # (M1, W*Cmid)

    # Rows whose 7-tap window crossed an image boundary (or that sit in a padding
    # row) are garbage; zero them.  Those zeros are exactly conv2's H-padding.
    hh = lax.broadcasted_iota(jnp.int32, (M1, 1), 0) % L
    f1 = jnp.where((hh >= PAD) & (hh < PAD + H), f1, 0.0)
    f1_16 = f1.astype(jnp.bfloat16)                              # single cast for conv2

    # ---- conv2 (+ folded bias & BN2): one im2col matmul.
    x2 = jnp.concatenate([f1_16[kh:kh + M2] for kh in range(K)], axis=1)
    acc2 = jnp.dot(x2, w2_ref[...], preferred_element_type=jnp.float32)

    # Residual (identity = x, exact f32), re-read from the ref right before use so the
    # full f32 input block is not held live across both convs.
    ident = xb_ref[0, 2 * PAD:2 * PAD + M2, :]
    out = jnp.maximum(acc2 + t2_ref[...] + ident, 0.0)           # (M2, W*Cout)

    # Dense store of the M2 useful rows; the K-1 tail rows of the output block are
    # never read back by the wrapper.
    o_ref[0, 0:M2, :] = out


def spatial_residual_block_lane(x_lane, W, w1, b1, g1, be1, m1, v1,
                                w2, b2, g2, be2, m2, v2, *, batch_tile=24):
    """Lane-dense entry point: x_lane is (N, H, W*Cin) float32 (NHWC flattened so the
    channel index is fastest within a lane group).  Returns (N, H, W*Cout)."""
    N, H, WCi = x_lane.shape
    Cin = WCi // W
    Cmid = w1.shape[0]
    Cout = w2.shape[0]
    # TODO(synk): resampleInput (1x1 conv + BN) branch for Cin != Cout not implemented.
    assert Cin == Cout, "default config: in_channels[0] == out_channels[-1]"

    L = H + 2 * PAD
    WCm, WCo = W * Cmid, W * Cout

    # Grid sizing: always >=2 grid steps when N >= 2 (megacore on v7x, DMA/compute
    # pipelining everywhere), while targeting ~0.25-0.5 MB row tiles for large N.
    Bt = max(1, min(batch_tile, pl.cdiv(N, 2)))
    Ng = pl.cdiv(N, Bt)
    Np = Ng * Bt

    # Per-image (PAD,PAD) H padding plus a (PAD,PAD) zero halo per block.  Both pads
    # fuse into the single relayout pass; they let the kernel avoid any in-kernel
    # (sublane-misaligned) concatenate/copy for conv2's padding.
    x_pad = jnp.pad(x_lane, ((0, Np - N), (PAD, PAD), (0, 0)))          # (Np, L, WCi)
    x_blocks = jnp.pad(x_pad.reshape(Ng, Bt * L, WCi),
                       ((0, 0), (PAD, PAD), (0, 0)))                    # (Ng, Bt*L+6, WCi)

    # ---- fold conv bias + eval-mode BN into weights / one per-lane shift ----
    s1 = g1 / jnp.sqrt(v1 + EPS)
    s2 = g2 / jnp.sqrt(v2 + EPS)
    w1_taps = jnp.transpose(w1[..., 0], (2, 1, 0)) * s1[None, None, :]  # (K, Cin, Cmid)
    w2_taps = jnp.transpose(w2[..., 0], (2, 1, 0)) * s2[None, None, :]  # (K, Cmid, Cout)
    t1f = jnp.tile(b1 * s1 + (be1 - m1 * s1), W).reshape(1, WCm).astype(jnp.float32)
    t2f = jnp.tile(b2 * s2 + (be2 - m2 * s2), W).reshape(1, WCo).astype(jnp.float32)

    # im2col-stacked block-diagonal taps: (K*W*Ci, W*Co).  Each conv becomes ONE
    # lane-dense matmul with a K*W*Ci-deep contraction.
    # TODO(synk): at large W*C the block-diagonal form wastes W x MXU FLOPs and VMEM;
    #             for C >= 128 put C directly on lanes (no block-diag) or tile W/C.
    eye = jnp.eye(W, dtype=jnp.float32)

    def stacked(taps):
        kwixo = jnp.einsum('wx,kio->kwixo', eye, taps)   # (K, W, Ci, W, Co)
        return kwixo.reshape(K * W * taps.shape[1], W * taps.shape[2])

    w1_st = stacked(w1_taps).astype(jnp.bfloat16)        # (K*WCi, WCm)
    w2_st = stacked(w2_taps).astype(jnp.bfloat16)        # (K*WCm, WCo)

    kernel = functools.partial(_res_block_kernel, H=H, L=L)

    out_flat = pl.pallas_call(
        kernel,
        out_shape=jax.ShapeDtypeStruct((Ng, Bt * L, WCo), jnp.float32),
        grid_spec=pltpu.PrefetchScalarGridSpec(
            num_scalar_prefetch=0,
            grid=(Ng,),
            in_specs=[
                pl.BlockSpec((1, Bt * L + 2 * PAD, WCi), lambda g: (g, 0, 0)),  # x block
                pl.BlockSpec((K * WCi, WCm),             lambda g: (0, 0)),     # conv1 taps
                pl.BlockSpec((1, WCm),                   lambda g: (0, 0)),     # conv1 shift
                pl.BlockSpec((K * WCm, WCo),             lambda g: (0, 0)),     # conv2 taps
                pl.BlockSpec((1, WCo),                   lambda g: (0, 0)),     # conv2 shift
            ],
            out_specs=pl.BlockSpec((1, Bt * L, WCo), lambda g: (g, 0, 0)),
        ),
        compiler_params=pltpu.CompilerParams(
            dimension_semantics=("parallel",),      # batch tiles are independent
            vmem_limit_bytes=32 * 1024 * 1024,
        ),
    )(x_blocks, w1_st, t1f, w2_st, t2f)

    # Per image i, output row h lives at block row i*L + h; the K-1 tail rows and the
    # inter-image rows are discarded here.
    return out_flat.reshape(Np, L, WCo)[:N, :H, :]


def spatial_residual_block(x_nchw, w1, b1, g1, be1, m1, v1,
                           w2, b2, g2, be2, m2, v2, *, batch_tile=24):
    """NCHW wrapper.  In a full network, do this relayout once at the boundary and keep
    activations in the lane-dense (N, H, W*C) layout between residual blocks."""
    N, Cin, H, W = x_nchw.shape
    x_lane = jnp.transpose(x_nchw, (0, 2, 3, 1)).astype(jnp.float32).reshape(N, H, W * Cin)
    out = spatial_residual_block_lane(x_lane, W, w1, b1, g1, be1, m1, v1,
                                      w2, b2, g2, be2, m2, v2, batch_tile=batch_tile)
    Cout = w2.shape[0]
    return jnp.transpose(out.reshape(N, H, W, Cout), (0, 3, 1, 2))


def _reference(x, w1, b1, g1, be1, m1, v1, w2, b2, g2, be2, m2, v2):
    """Pure-JAX NCHW reference matching the PyTorch eval-mode forward."""
    def conv(x, w, b):
        y = lax.conv_general_dilated(x, w, window_strides=(1, 1),
                                     padding=((PAD, PAD), (0, 0)),
                                     dimension_numbers=('NCHW', 'OIHW', 'NCHW'))
        return y + b[None, :, None, None]

    def bn(x, g, be, m, v):
        return (x - m[None, :, None, None]) / jnp.sqrt(v[None, :, None, None] + EPS) \
               * g[None, :, None, None] + be[None, :, None, None]

    f = jnp.maximum(bn(conv(x, w1, b1), g1, be1, m1, v1), 0.0)
    f = bn(conv(f, w2, b2), g2, be2, m2, v2)
    f = f + x                     # resampleInput is None (Cin == Cout)
    return jnp.maximum(f, 0.0)


if __name__ == "__main__":
    N, C, H, W = 2, 8, 16, 16     # in_channels = out_channels = (8, 8); W*C = 128 lanes
    key = jax.random.PRNGKey(0)
    ks = jax.random.split(key, 13)

    x = jax.random.normal(ks[0], (N, C, H, W), jnp.float32)

    # conv weights in PyTorch layout (out, in, kH=7, kW=1)
    w1 = 0.1 * jax.random.normal(ks[1], (C, C, K, 1), jnp.float32)
    b1 = 0.1 * jax.random.normal(ks[2], (C,), jnp.float32)
    w2 = 0.1 * jax.random.normal(ks[3], (C, C, K, 1), jnp.float32)
    b2 = 0.1 * jax.random.normal(ks[4], (C,), jnp.float32)

    # BatchNorm params / running stats (deterministic synthetic values)
    g1 = 1.0 + 0.1 * jax.random.normal(ks[5], (C,), jnp.float32)
    be1 = 0.1 * jax.random.normal(ks[6], (C,), jnp.float32)
    m1 = 0.1 * jax.random.normal(ks[7], (C,), jnp.float32)
    v1 = jax.random.uniform(ks[8], (C,), jnp.float32, 0.5, 1.5)
    g2 = 1.0 + 0.1 * jax.random.normal(ks[9], (C,), jnp.float32)
    be2 = 0.1 * jax.random.normal(ks[10], (C,), jnp.float32)
    m2 = 0.1 * jax.random.normal(ks[11], (C,), jnp.float32)
    v2 = jax.random.uniform(ks[12], (C,), jnp.float32, 0.5, 1.5)

    args = (x, w1, b1, g1, be1, m1, v1, w2, b2, g2, be2, m2, v2)

    out = jax.jit(spatial_residual_block)(*args)
    out = jax.block_until_ready(out)

    ref = _reference(*args)
    assert out.shape == (N, C, H, W)
    # bf16 MXU operands (f32 accumulation) vs f32 reference -> loosened tolerance
    assert jnp.allclose(out, ref, atol=5e-2, rtol=5e-2), \
        f"max abs err = {jnp.max(jnp.abs(out - ref))}"

    print("KERNEL_OK")
</pallas_src>

<mosaic_0001>
module attributes {stable_mosaic.version = 11 : i64} {
  func.func @_res_block_kernel(%arg0: i32, %arg1: memref<1x28x128xf32, #tpu.memory_space<vmem>>, %arg2: memref<896x128xbf16, #tpu.memory_space<vmem>>, %arg3: memref<1x128xf32, #tpu.memory_space<vmem>>, %arg4: memref<896x128xbf16, #tpu.memory_space<vmem>>, %arg5: memref<1x128xf32, #tpu.memory_space<vmem>>, %arg6: memref<1x22x128xf32, #tpu.memory_space<vmem>>) attributes {dimension_semantics = [#tpu.dimension_semantics<parallel>], iteration_bounds = array<i64: 2>, scalar_prefetch = 0 : i64, scratch_operands = 0 : i64, tpu.core_type = #tpu.core_type<tc>, window_params = [{transform_indices = @transform_0, window_bounds = array<i64: 1, 28, 128>}, {pipeline_mode = #tpu.pipeline_mode<synchronous>, transform_indices = @transform_1, window_bounds = array<i64: 896, 128>}, {pipeline_mode = #tpu.pipeline_mode<synchronous>, transform_indices = @transform_2, window_bounds = array<i64: 1, 128>}, {pipeline_mode = #tpu.pipeline_mode<synchronous>, transform_indices = @transform_3, window_bounds = array<i64: 896, 128>}, {pipeline_mode = #tpu.pipeline_mode<synchronous>, transform_indices = @transform_4, window_bounds = array<i64: 1, 128>}, {transform_indices = @transform_5, window_bounds = array<i64: 1, 22, 128>}]} {
    %c0 = arith.constant 0 : index
    %c0_0 = arith.constant 0 : index
    %c0_1 = arith.constant 0 : index
    %0 = vector.load %arg1[%c0, %c0_0, %c0_1] : memref<1x28x128xf32, #tpu.memory_space<vmem>>, vector<1x28x128xf32>
    %1 = vector.shape_cast %0 : vector<1x28x128xf32> to vector<28x128xf32>
    %2 = arith.truncf %1 : vector<28x128xf32> to vector<28x128xbf16>
    %3 = vector.extract_strided_slice %2 {offsets = [0, 0], sizes = [22, 128], strides = [1, 1]} : vector<28x128xbf16> to vector<22x128xbf16>
    %4 = vector.extract_strided_slice %2 {offsets = [1, 0], sizes = [22, 128], strides = [1, 1]} : vector<28x128xbf16> to vector<22x128xbf16>
    %5 = vector.extract_strided_slice %2 {offsets = [2, 0], sizes = [22, 128], strides = [1, 1]} : vector<28x128xbf16> to vector<22x128xbf16>
    %6 = vector.extract_strided_slice %2 {offsets = [3, 0], sizes = [22, 128], strides = [1, 1]} : vector<28x128xbf16> to vector<22x128xbf16>
    %7 = vector.extract_strided_slice %2 {offsets = [4, 0], sizes = [22, 128], strides = [1, 1]} : vector<28x128xbf16> to vector<22x128xbf16>
    %8 = vector.extract_strided_slice %2 {offsets = [5, 0], sizes = [22, 128], strides = [1, 1]} : vector<28x128xbf16> to vector<22x128xbf16>
    %9 = vector.extract_strided_slice %2 {offsets = [6, 0], sizes = [22, 128], strides = [1, 1]} : vector<28x128xbf16> to vector<22x128xbf16>
    %10 = tpu.concatenate %3, %4, %5, %6, %7, %8, %9 in 1 : vector<22x128xbf16>, vector<22x128xbf16>, vector<22x128xbf16>, vector<22x128xbf16>, vector<22x128xbf16>, vector<22x128xbf16>, vector<22x128xbf16> -> vector<22x896xbf16>
    %c0_2 = arith.constant 0 : index
    %c0_3 = arith.constant 0 : index
    %11 = vector.load %arg2[%c0_2, %c0_3] : memref<896x128xbf16, #tpu.memory_space<vmem>>, vector<896x128xbf16>
    %cst = arith.constant dense<0.000000e+00> : vector<22x128xf32>
    %12 = tpu.matmul %10, %11, %cst {dimension_numbers = #tpu.dot_dimension_numbers<[1], [0], [0], [1], [0, 0, 1, 1], [], []>} : vector<22x896xbf16>, vector<896x128xbf16>, vector<22x128xf32> -> vector<22x128xf32>
    %c0_4 = arith.constant 0 : index
    %c0_5 = arith.constant 0 : index
    %13 = vector.load %arg3[%c0_4, %c0_5] : memref<1x128xf32, #tpu.memory_space<vmem>>, vector<1x128xf32>
    %14 = vector.broadcast %13 : vector<1x128xf32> to vector<22x128xf32>
    %15 = arith.addf %12, %14 : vector<22x128xf32>
    %cst_6 = arith.constant 0.000000e+00 : f32
    %16 = vector.broadcast %cst_6 : f32 to vector<22x128xf32>
    %17 = arith.maximumf %15, %16 : vector<22x128xf32>
    %18 = tpu.iota {dimensions = array<i32: 0>} : vector<22x1xi32>
    %c22_i32 = arith.constant 22 : i32
    %c0_i32 = arith.constant 0 : i32
    %19 = arith.cmpi eq, %c22_i32, %c0_i32 : i32
    %c1_i32 = arith.constant 1 : i32
    %20 = arith.select %19, %c1_i32, %c22_i32 : i32
    %21 = vector.broadcast %20 : i32 to vector<22x1xi32>
    %22 = arith.remsi %18, %21 : vector<22x1xi32>
    %c0_i32_7 = arith.constant 0 : i32
    %23 = vector.broadcast %c0_i32_7 : i32 to vector<22x1xi32>
    %24 = arith.cmpi ne, %22, %23 : vector<22x1xi32>
    %c0_i32_8 = arith.constant 0 : i32
    %25 = vector.broadcast %c0_i32_8 : i32 to vector<22x1xi32>
    %26 = arith.cmpi slt, %22, %25 : vector<22x1xi32>
    %c0_i32_9 = arith.constant 0 : i32
    %27 = arith.cmpi slt, %20, %c0_i32_9 : i32
    %28 = vector.broadcast %27 : i1 to vector<22x1xi1>
    %29 = vector.broadcast %28 : vector<22x1xi1> to vector<22x1xi1>
    %30 = arith.xori %26, %29 : vector<22x1xi1>
    %31 = arith.andi %30, %24 : vector<22x1xi1>
    %32 = vector.broadcast %20 : i32 to vector<22x1xi32>
    %33 = arith.addi %22, %32 : vector<22x1xi32>
    %34 = arith.select %31, %33, %22 : vector<22x1xi1>, vector<22x1xi32>
    %c3_i32 = arith.constant 3 : i32
    %35 = vector.broadcast %c3_i32 : i32 to vector<22x1xi32>
    %36 = arith.cmpi sge, %34, %35 : vector<22x1xi32>
    %c19_i32 = arith.constant 19 : i32
    %37 = vector.broadcast %c19_i32 : i32 to vector<22x1xi32>
    %38 = arith.cmpi slt, %34, %37 : vector<22x1xi32>
    %39 = arith.andi %36, %38 : vector<22x1xi1>
    %cst_10 = arith.constant 0.000000e+00 : f32
    %40 = vector.shape_cast %39 : vector<22x1xi1> to vector<22x1xi1>
    %41 = vector.broadcast %40 : vector<22x1xi1> to vector<22x128xi1>
    %42 = vector.broadcast %cst_10 : f32 to vector<22x128xf32>
    %43 = arith.select %41, %17, %42 : vector<22x128xi1>, vector<22x128xf32>
    %44 = arith.truncf %43 : vector<22x128xf32> to vector<22x128xbf16>
    %45 = vector.extract_strided_slice %44 {offsets = [0, 0], sizes = [16, 128], strides = [1, 1]} : vector<22x128xbf16> to vector<16x128xbf16>
    %46 = vector.extract_strided_slice %44 {offsets = [1, 0], sizes = [16, 128], strides = [1, 1]} : vector<22x128xbf16> to vector<16x128xbf16>
    %47 = vector.extract_strided_slice %44 {offsets = [2, 0], sizes = [16, 128], strides = [1, 1]} : vector<22x128xbf16> to vector<16x128xbf16>
    %48 = vector.extract_strided_slice %44 {offsets = [3, 0], sizes = [16, 128], strides = [1, 1]} : vector<22x128xbf16> to vector<16x128xbf16>
    %49 = vector.extract_strided_slice %44 {offsets = [4, 0], sizes = [16, 128], strides = [1, 1]} : vector<22x128xbf16> to vector<16x128xbf16>
    %50 = vector.extract_strided_slice %44 {offsets = [5, 0], sizes = [16, 128], strides = [1, 1]} : vector<22x128xbf16> to vector<16x128xbf16>
    %51 = vector.extract_strided_slice %44 {offsets = [6, 0], sizes = [16, 128], strides = [1, 1]} : vector<22x128xbf16> to vector<16x128xbf16>
    %52 = tpu.concatenate %45, %46, %47, %48, %49, %50, %51 in 1 : vector<16x128xbf16>, vector<16x128xbf16>, vector<16x128xbf16>, vector<16x128xbf16>, vector<16x128xbf16>, vector<16x128xbf16>, vector<16x128xbf16> -> vector<16x896xbf16>
    %c0_11 = arith.constant 0 : index
    %c0_12 = arith.constant 0 : index
    %53 = vector.load %arg4[%c0_11, %c0_12] : memref<896x128xbf16, #tpu.memory_space<vmem>>, vector<896x128xbf16>
    %cst_13 = arith.constant dense<0.000000e+00> : vector<16x128xf32>
    %54 = tpu.matmul %52, %53, %cst_13 {dimension_numbers = #tpu.dot_dimension_numbers<[1], [0], [0], [1], [0, 0, 1, 1], [], []>} : vector<16x896xbf16>, vector<896x128xbf16>, vector<16x128xf32> -> vector<16x128xf32>
    %c0_14 = arith.constant 0 : index
    %c6 = arith.constant 6 : index
    %c0_15 = arith.constant 0 : index
    %55 = vector.load %arg1[%c0_14, %c6, %c0_15] : memref<1x28x128xf32, #tpu.memory_space<vmem>>, vector<1x16x128xf32>
    %56 = vector.shape_cast %55 : vector<1x16x128xf32> to vector<16x128xf32>
    %c0_16 = arith.constant 0 : index
    %c0_17 = arith.constant 0 : index
    %57 = vector.load %arg5[%c0_16, %c0_17] : memref<1x128xf32, #tpu.memory_space<vmem>>, vector<1x128xf32>
    %58 = vector.broadcast %57 : vector<1x128xf32> to vector<16x128xf32>
    %59 = arith.addf %54, %58 : vector<16x128xf32>
    %60 = arith.addf %59, %56 : vector<16x128xf32>
    %cst_18 = arith.constant 0.000000e+00 : f32
    %61 = vector.broadcast %cst_18 : f32 to vector<16x128xf32>
    %62 = arith.maximumf %60, %61 : vector<16x128xf32>
    %c0_19 = arith.constant 0 : index
    %c0_20 = arith.constant 0 : index
    %c0_21 = arith.constant 0 : index
    %63 = vector.load %arg6[%c0_19, %c0_20, %c0_21] : memref<1x22x128xf32, #tpu.memory_space<vmem>>, vector<1x16x128xf32>
    %64 = vector.shape_cast %63 : vector<1x16x128xf32> to vector<16x128xf32>
    %65 = vector.shape_cast %62 : vector<16x128xf32> to vector<1x16x128xf32>
    tpu.vector_store %arg6[%c0_19, %c0_20, %c0_21], %65 {strides = array<i32>} : memref<1x22x128xf32, #tpu.memory_space<vmem>>, vector<1x16x128xf32>,
    return
  }
  func.func @transform_0(%arg0: i32) -> (i32, i32, i32) {
    %c0_i32 = arith.constant 0 : i32
    %c0_i32_0 = arith.constant 0 : i32
    %c0_i32_1 = arith.constant 0 : i32
    return %arg0, %c0_i32, %c0_i32_0 : i32, i32, i32
  }
  func.func @transform_1(%arg0: i32) -> (i32, i32) {
    %c0_i32 = arith.constant 0 : i32
    %c0_i32_0 = arith.constant 0 : i32
    %c0_i32_1 = arith.constant 0 : i32
    return %c0_i32, %c0_i32_0 : i32, i32
  }
  func.func @transform_2(%arg0: i32) -> (i32, i32) {
    %c0_i32 = arith.constant 0 : i32
    %c0_i32_0 = arith.constant 0 : i32
    %c0_i32_1 = arith.constant 0 : i32
    return %c0_i32, %c0_i32_0 : i32, i32
  }
  func.func @transform_3(%arg0: i32) -> (i32, i32) {
    %c0_i32 = arith.constant 0 : i32
    %c0_i32_0 = arith.constant 0 : i32
    %c0_i32_1 = arith.constant 0 : i32
    return %c0_i32, %c0_i32_0 : i32, i32
  }
  func.func @transform_4(%arg0: i32) -> (i32, i32) {
    %c0_i32 = arith.constant 0 : i32
    %c0_i32_0 = arith.constant 0 : i32
    %c0_i32_1 = arith.constant 0 : i32
    return %c0_i32, %c0_i32_0 : i32, i32
  }
  func.func @transform_5(%arg0: i32) -> (i32, i32, i32) {
    %c0_i32 = arith.constant 0 : i32
    %c0_i32_0 = arith.constant 0 : i32
    %c0_i32_1 = arith.constant 0 : i32
    return %arg0, %c0_i32, %c0_i32_0 : i32, i32, i32
  }
}

</mosaic_0001>

<llo_original>
// kernel: tile.13
$region0: #{tile.13}
  #allocation0 [shape = 's32[1]{0}', space=sflag, size = 0x4, scoped, tag = 'scoped memory for tile.13']
  %s0 = inlined_call_operand.vmem [shape: f32[8], index: 0, kind: input, shape index: {}]
  %s1 = inlined_call_operand.vmem [shape: f32[16,8], index: 1, kind: output, shape index: {}]
  // Predicated region
  $region2: #{tile.13} parent=0 // pred_check
    _
  $region3: #{tile.13} parent=0 // pred_check_branch
    %3 = sbr.rel (0) target = $region5
  $region4: #{tile.13} parent=0 // pred_region
    _
  $region5: #{tile.13} parent=0 // pred_fallthru
    _
  %v4 = vld [vmem:[%s0] ss:$0 sm:$0xff]
  %5 = vst [vmem:[%s1] sm:$0xff] %v4
  %s6 = scalar_lea.vmem %s1, 8
  %7 = vst [vmem:[%s6] sm:$0xff] %v4

// kernel: tile.14
$region0: #{tile.14}
  %s0 = inlined_call_operand.vmem [shape: f32[16,8], index: 0, kind: input, shape index: {}]
  %s1 = inlined_call_operand.vmem [shape: f32[1,128], index: 1, kind: output, shape index: {}]
  $region1: #{tile.14} parent=0
    #allocation0 [shape = 'u8[4096]{0}', space=vmem, size = 0x1000, scoped, tag = 'scoped mem for output reshape']
    %v2 = vld [vmem:[%s0] sm:$0x1]
    %vm3 = vcmask 64512
    %4 = vst.msk [vmem:[#allocation0] sm:$0x1] %vm3, %v2
    %s5 = scalar_lea.vmem %s0, 15
    %v6 = vld [vmem:[%s5] sm:$0x1]
    %7 = vrot.lane.b32.xlu0 %v6, 120
    %v8 = vpop.permute.xlu0 %7
    %vm9 = vcmask 1048512
    %10 = vst.msk [vmem:[#allocation0] sm:$0x1] %vm9, %v8
    %s11 = scalar_lea.vmem %s0, 14
    %v12 = vld [vmem:[%s11] sm:$0x1]
    %13 = vrot.lane.b32.xlu0 %v12, 112
    %v14 = vpop.permute.xlu0 %13
    %vm15 = vcmask 982912
    %16 = vst.msk [vmem:[#allocation0] sm:$0x1] %vm15, %v14
    %s17 = scalar_lea.vmem %s0, 13
    %v18 = vld [vmem:[%s17] sm:$0x1]
    %19 = vrot.lane.b32.xlu0 %v18, 104
    %v20 = vpop.permute.xlu0 %19
    %vm21 = vcmask 917312
    %22 = vst.msk [vmem:[#allocation0] sm:$0x1] %vm21, %v20
    %s23 = scalar_lea.vmem %s0, 12
    %v24 = vld [vmem:[%s23] sm:$0x1]
    %25 = vrot.lane.b32.xlu0 %v24, 96
    %v26 = vpop.permute.xlu0 %25
    %vm27 = vcmask 851712
    %28 = vst.msk [vmem:[#allocation0] sm:$0x1] %vm27, %v26
    %s29 = scalar_lea.vmem %s0, 11
    %v30 = vld [vmem:[%s29] sm:$0x1]
    %31 = vrot.lane.b32.xlu0 %v30, 88
    %v32 = vpop.permute.xlu0 %31
    %vm33 = vcmask 786112
    %34 = vst.msk [vmem:[#allocation0] sm:$0x1] %vm33, %v32
    %s35 = scalar_lea.vmem %s0, 10
    %v36 = vld [vmem:[%s35] sm:$0x1]
    %37 = vrot.lane.b32.xlu0 %v36, 80
    %v38 = vpop.permute.xlu0 %37
    %vm39 = vcmask 720512
    %40 = vst.msk [vmem:[#allocation0] sm:$0x1] %vm39, %v38
    %s41 = scalar_lea.vmem %s0, 9
    %v42 = vld [vmem:[%s41] sm:$0x1]
    %43 = vrot.lane.b32.xlu0 %v42, 72
    %v44 = vpop.permute.xlu0 %43
    %vm45 = vcmask 654912
    %46 = vst.msk [vmem:[#allocation0] sm:$0x1] %vm45, %v44
    %s47 = scalar_lea.vmem %s0, 8
    %v48 = vld [vmem:[%s47] sm:$0x1]
    %49 = vrot.lane.b32.xlu0 %v48, 64
    %v50 = vpop.permute.xlu0 %49
    %vm51 = vcmask 589312
    %52 = vst.msk [vmem:[#allocation0] sm:$0x1] %vm51, %v50
    %s53 = scalar_lea.vmem %s0, 7
    %v54 = vld [vmem:[%s53] sm:$0x1]
    %55 = vrot.lane.b32.xlu0 %v54, 56
    %v56 = vpop.permute.xlu0 %55
    %vm57 = vcmask 523712
    %58 = vst.msk [vmem:[#allocation0] sm:$0x1] %vm57, %v56
    %s59 = scalar_lea.vmem %s0, 6
    %v60 = vld [vmem:[%s59] sm:$0x1]
    %61 = vrot.lane.b32.xlu0 %v60, 48
    %v62 = vpop.permute.xlu0 %61
    %vm63 = vcmask 458112
    %64 = vst.msk [vmem:[#allocation0] sm:$0x1] %vm63, %v62
    %s65 = scalar_lea.vmem %s0, 5
    %v66 = vld [vmem:[%s65] sm:$0x1]
    %67 = vrot.lane.b32.xlu0 %v66, 40
    %v68 = vpop.permute.xlu0 %67
    %vm69 = vcmask 392512
    %70 = vst.msk [vmem:[#allocation0] sm:$0x1] %vm69, %v68
    %s71 = scalar_lea.vmem %s0, 4
    %v72 = vld [vmem:[%s71] sm:$0x1]
    %73 = vrot.lane.b32.xlu0 %v72, 32
    %v74 = vpop.permute.xlu0 %73
    %vm75 = vcmask 326912
    %76 = vst.msk [vmem:[#allocation0] sm:$0x1] %vm75, %v74
    %s77 = scalar_lea.vmem %s0, 3
    %v78 = vld [vmem:[%s77] sm:$0x1]
    %79 = vrot.lane.b32.xlu0 %v78, 24
    %v80 = vpop.permute.xlu0 %79
    %vm81 = vcmask 261312
    %82 = vst.msk [vmem:[#allocation0] sm:$0x1] %vm81, %v80
    %s83 = scalar_lea.vmem %s0, 2
    %v84 = vld [vmem:[%s83] sm:$0x1]
    %85 = vrot.lane.b32.xlu0 %v84, 16
    %v86 = vpop.permute.xlu0 %85
    %vm87 = vcmask 195712
    %88 = vst.msk [vmem:[#allocation0] sm:$0x1] %vm87, %v86
    %s89 = scalar_lea.vmem %s0, 1
    %v90 = vld [vmem:[%s89] sm:$0x1]
    %91 = vrot.lane.b32.xlu0 %v90, 8
    %v92 = vpop.permute.xlu0 %91
    %vm93 = vcmask 130112
    %94 = vst.msk [vmem:[#allocation0] sm:$0x1] %vm93, %v92
    %s96 = sshll.u32 1, 1
    %s97 = ssub.s32 %s96, 1
    %v99 = vld [vmem:[#allocation0] sm:%s97]
    %s100 = sshll.u32 1, 1
    %s101 = ssub.s32 %s100, 1
    %102 = vst [vmem:[%s1] sm:%s101] %v99

// kernel: spatial_residual_block.1
$region0: #{spatial_residual_block.1}
  #allocation0 [shape = 'u32[]', space=smem, size = 0x4, offset = 0x4, fixed_abs, tag = 'smem constant byte address 0x4 - core index']
  #allocation1 [shape = 'u32[144,128]{1,0:T(1,128)}', space=vmem, size = 0x12000, scoped, tag = 'internal scratch']
  %s0 = inlined_call_operand.vmem [shape: f32[2,28,128], index: 0, kind: input, shape index: {}]
  %s1 = inlined_call_operand.vmem [shape: bf16[896,128], index: 1, kind: input, shape index: {}]
  %s2 = inlined_call_operand.vmem [shape: f32[1,128], index: 2, kind: input, shape index: {}]
  %s3 = inlined_call_operand.vmem [shape: bf16[896,128], index: 3, kind: input, shape index: {}]
  %s4 = inlined_call_operand.vmem [shape: f32[1,128], index: 4, kind: input, shape index: {}]
  %s5 = inlined_call_operand.vmem [shape: f32[2,22,128], index: 5, kind: output, shape index: {}]
  %s6 = sld [smem:[#allocation0]]
  $region53: #{spatial_residual_block.1} parent=0
    _
  %s8 = ssub.s32 1, %s6
  %s9 = scalar_select 0, %s8, %s6
  loop: start=0, step=1, limit=4
  $region2: #{spatial_residual_block.1} parent=0 // loop_pre_header
    _
  $region3: #{spatial_residual_block.1} parent=0 // loop_header
    %s11 = sphi 0, %s15
    %p12 = scmp.ge.s32.totalorder %s11, 4
    %s21 = sphi 0, %s23
    %s24 = sphi 0, %s21
    %s25 = sphi 0, %s24
    %s41 = sphi 0, %s25
    %s45 = sphi 0, %s45
    %s47 = sphi 0, %s45
    %s48 = sphi 0, %s47
    %s62 = sphi 0, %s48
    %s66 = sphi 0, %s66
    %s68 = sphi 0, %s66
    %s69 = sphi 0, %s68
    %s83 = sphi 0, %s69
    %s87 = sphi 0, %s87
    %s89 = sphi 0, %s87
    %s90 = sphi 0, %s89
    %s104 = sphi 0, %s90
    %s108 = sphi 0, %s108
    %s110 = sphi 0, %s108
    %s111 = sphi 0, %s110
    %s125 = sphi 0, %s111
    %s131 = sphi 0, %s133
    %s134 = sphi 0, %s131
    %s135 = sphi 0, %s134
    %s151 = sphi 0, %s135
  $region4: #{spatial_residual_block.1} parent=0 // loop_header_branch
    %14 = sbr.rel (%p12) target = $region8
  $region5: #{spatial_residual_block.1} parent=0 // loop_body
    %s16 = ssub.s32 %s11, 1
    %s17 = ssub.s32 %s11, 2
    %s18 = sadd.s32 %s11, 1
    %s19 = ssub.s32 %s11, %s18
    %p20 = scmp.eq.s32.totalorder %s19, 0
    %s22 = sadd.s32 %s21, 1
    %s23 = scalar_select %p20, %s21, %s22
    %p26 = pneg %p20
    %p27 = scmp.eq.s32.totalorder %s11, 1
    %p28 = por %p26, %p27
    %p29 = scmp.ne.s32.totalorder %s21, %s24
    %p30 = scmp.eq.s32.totalorder %s11, 0
    %p31 = por %p29, %p30
    %p32 = scmp.ne.s32.totalorder %s21, %s24
    %p33 = scmp.eq.s32.totalorder %s16, 1
    %p34 = por %p32, %p33
    %p35 = scmp.ne.s32.totalorder %s24, %s25
    %p36 = scmp.eq.s32.totalorder %s16, 0
    %p37 = por %p35, %p36
    %p38 = scmp.ne.s32.totalorder %s24, %s25
    %p39 = scmp.eq.s32.totalorder %s17, 1
    %p40 = por %p38, %p39
    %p42 = scmp.ne.s32.totalorder %s25, %s41
    %p43 = scmp.eq.s32.totalorder %s17, 0
    %p44 = por %p42, %p43
    %s46 = sadd.s32 %s45, 1
    %p49 = scmp.eq.s32.totalorder %s11, 1
    %p50 = scmp.ne.s32.totalorder %s45, %s47
    %p51 = scmp.eq.s32.totalorder %s11, 0
    %p52 = por %p50, %p51
    %p53 = scmp.ne.s32.totalorder %s45, %s47
    %p54 = scmp.eq.s32.totalorder %s16, 1
    %p55 = por %p53, %p54
    %p56 = scmp.ne.s32.totalorder %s47, %s48
    %p57 = scmp.eq.s32.totalorder %s16, 0
    %p58 = por %p56, %p57
    %p59 = scmp.ne.s32.totalorder %s47, %s48
    %p60 = scmp.eq.s32.totalorder %s17, 1
    %p61 = por %p59, %p60
    %p63 = scmp.ne.s32.totalorder %s48, %s62
    %p64 = scmp.eq.s32.totalorder %s17, 0
    %p65 = por %p63, %p64
    %s67 = sadd.s32 %s66, 1
    %p70 = scmp.eq.s32.totalorder %s11, 1
    %p71 = scmp.ne.s32.totalorder %s66, %s68
    %p72 = scmp.eq.s32.totalorder %s11, 0
    %p73 = por %p71, %p72
    %p74 = scmp.ne.s32.totalorder %s66, %s68
    %p75 = scmp.eq.s32.totalorder %s16, 1
    %p76 = por %p74, %p75
    %p77 = scmp.ne.s32.totalorder %s68, %s69
    %p78 = scmp.eq.s32.totalorder %s16, 0
    %p79 = por %p77, %p78
    %p80 = scmp.ne.s32.totalorder %s68, %s69
    %p81 = scmp.eq.s32.totalorder %s17, 1
    %p82 = por %p80, %p81
    %p84 = scmp.ne.s32.totalorder %s69, %s83
    %p85 = scmp.eq.s32.totalorder %s17, 0
    %p86 = por %p84, %p85
    %s88 = sadd.s32 %s87, 1
    %p91 = scmp.eq.s32.totalorder %s11, 1
    %p92 = scmp.ne.s32.totalorder %s87, %s89
    %p93 = scmp.eq.s32.totalorder %s11, 0
    %p94 = por %p92, %p93
    %p95 = scmp.ne.s32.totalorder %s87, %s89
    %p96 = scmp.eq.s32.totalorder %s16, 1
    %p97 = por %p95, %p96
    %p98 = scmp.ne.s32.totalorder %s89, %s90
    %p99 = scmp.eq.s32.totalorder %s16, 0
    %p100 = por %p98, %p99
    %p101 = scmp.ne.s32.totalorder %s89, %s90
    %p102 = scmp.eq.s32.totalorder %s17, 1
    %p103 = por %p101, %p102
    %p105 = scmp.ne.s32.totalorder %s90, %s104
    %p106 = scmp.eq.s32.totalorder %s17, 0
    %p107 = por %p105, %p106
    %s109 = sadd.s32 %s108, 1
    %p112 = scmp.eq.s32.totalorder %s11, 1
    %p113 = scmp.ne.s32.totalorder %s108, %s110
    %p114 = scmp.eq.s32.totalorder %s11, 0
    %p115 = por %p113, %p114
    %p116 = scmp.ne.s32.totalorder %s108, %s110
    %p117 = scmp.eq.s32.totalorder %s16, 1
    %p118 = por %p116, %p117
    %p119 = scmp.ne.s32.totalorder %s110, %s111
    %p120 = scmp.eq.s32.totalorder %s16, 0
    %p121 = por %p119, %p120
    %p122 = scmp.ne.s32.totalorder %s110, %s111
    %p123 = scmp.eq.s32.totalorder %s17, 1
    %p124 = por %p122, %p123
    %p126 = scmp.ne.s32.totalorder %s111, %s125
    %p127 = scmp.eq.s32.totalorder %s17, 0
    %p128 = por %p126, %p127
    %s129 = ssub.s32 %s11, %s18
    %p130 = scmp.eq.s32.totalorder %s129, 0
    %s132 = sadd.s32 %s131, 1
    %s133 = scalar_select %p130, %s131, %s132
    %p136 = pneg %p130
    %p137 = scmp.eq.s32.totalorder %s11, 1
    %p138 = por %p136, %p137
    %p139 = scmp.ne.s32.totalorder %s131, %s134
    %p140 = scmp.eq.s32.totalorder %s11, 0
    %p141 = por %p139, %p140
    %p142 = scmp.ne.s32.totalorder %s131, %s134
    %p143 = scmp.eq.s32.totalorder %s16, 1
    %p144 = por %p142, %p143
    %p145 = scmp.ne.s32.totalorder %s134, %s135
    %p146 = scmp.eq.s32.totalorder %s16, 0
    %p147 = por %p145, %p146
    %p148 = scmp.ne.s32.totalorder %s134, %s135
    %p149 = scmp.eq.s32.totalorder %s17, 1
    %p150 = por %p148, %p149
    %p152 = scmp.ne.s32.totalorder %s135, %s151
    %p153 = scmp.eq.s32.totalorder %s17, 0
    %p154 = por %p152, %p153
    %p155 = scmp.le.s32.totalorder 1, %s11
    %p156 = scmp.lt.s32.totalorder %s11, 3
    %p157 = pnand %p155, %p156
    %p158 = pneg %p157
    // Predicated region
    $region9: #{spatial_residual_block.1} parent=5 // pred_check
      _
    $region10: #{spatial_residual_block.1} parent=5 // pred_check_branch
      %160 = sbr.rel (%p157) target = $region12
    $region11: #{spatial_residual_block.1} parent=5 // pred_region
      %s161 = ssub.s32 %s11, 1
      // Predicated region
      $region13: #{spatial_residual_block.1} parent=11 // pred_check
        %p162 = pneg %p58
      $region14: #{spatial_residual_block.1} parent=11 // pred_check_branch
        %164 = sbr.rel (%p162) target = $region16
      $region15: #{spatial_residual_block.1} parent=11 // pred_region
        _
      $region16: #{spatial_residual_block.1} parent=11 // pred_fallthru
        _
      // Predicated region
      $region17: #{spatial_residual_block.1} parent=11 // pred_check
        %p165 = pneg %p79
      $region18: #{spatial_residual_block.1} parent=11 // pred_check_branch
        %167 = sbr.rel (%p165) target = $region20
      $region19: #{spatial_residual_block.1} parent=11 // pred_region
        _
      $region20: #{spatial_residual_block.1} parent=11 // pred_fallthru
        _
      // Predicated region
      $region21: #{spatial_residual_block.1} parent=11 // pred_check
        %p168 = pneg %p100
      $region22: #{spatial_residual_block.1} parent=11 // pred_check_branch
        %170 = sbr.rel (%p168) target = $region24
      $region23: #{spatial_residual_block.1} parent=11 // pred_region
        _
      $region24: #{spatial_residual_block.1} parent=11 // pred_fallthru
        _
      // Predicated region
      $region25: #{spatial_residual_block.1} parent=11 // pred_check
        %p171 = pneg %p121
      $region26: #{spatial_residual_block.1} parent=11 // pred_check_branch
        %173 = sbr.rel (%p171) target = $region28
      $region27: #{spatial_residual_block.1} parent=11 // pred_region
        _
      $region28: #{spatial_residual_block.1} parent=11 // pred_fallthru
        _
    $region12: #{spatial_residual_block.1} parent=5 // pred_fallthru
      _
    %p174 = scmp.lt.s32.totalorder %s11, 2
    // Predicated region
    $region29: #{spatial_residual_block.1} parent=5 // pred_check
      %p175 = pneg %p174
    $region30: #{spatial_residual_block.1} parent=5 // pred_check_branch
      %177 = sbr.rel (%p175) target = $region32
    $region31: #{spatial_residual_block.1} parent=5 // pred_region
      // Predicated region
      $region33: #{spatial_residual_block.1} parent=31 // pred_check
        %p178 = pneg %p31
      $region34: #{spatial_residual_block.1} parent=31 // pred_check_branch
        %180 = sbr.rel (%p178) target = $region36
      $region35: #{spatial_residual_block.1} parent=31 // pred_region
        %p181 = scmp.lt.s32.totalorder %s11, 1
        %s182 = scalar_select %p181, %s11, 1
        %s183 = smul.addr %s182, 4
        %s184 = smul.addr %s183, 8
        %s185 = scalar_lea.vmem %s0, %s184
      $region36: #{spatial_residual_block.1} parent=31 // pred_fallthru
        _
    $region32: #{spatial_residual_block.1} parent=5 // pred_fallthru
      _
    %p186 = scmp.le.s32.totalorder 1, %s11
    %p187 = scmp.lt.s32.totalorder %s11, 3
    %p188 = pnand %p186, %p187
    %p189 = pneg %p188
    // Predicated region
    $region37: #{spatial_residual_block.1} parent=5 // pred_check
      _
    $region38: #{spatial_residual_block.1} parent=5 // pred_check_branch
      %191 = sbr.rel (%p188) target = $region40
    $region39: #{spatial_residual_block.1} parent=5 // pred_region
      %s192 = ssub.s32 %s11, 1
      %p193 = scmp.lt.s32.totalorder %s16, 1
      %s194 = scalar_select %p193, %s16, 1
      %s195 = smul.addr %s194, 4
      %s196 = smul.addr %s195, 8
      %s197 = scalar_lea.vmem %s0, %s196
      %p198 = pneg %p37
      %p199 = pneg %p34
      %p200 = pneg %p58
      %p201 = pneg %p55
      %p202 = pneg %p79
      %p203 = pneg %p76
      %p204 = pneg %p100
      %p205 = pneg %p97
      %p206 = pneg %p121
      %p207 = pneg %p118
      %p208 = pneg %p147
      %p209 = pneg %p144
      %p210 = scmp.lt.s32.totalorder %s16, 1
      %s211 = scalar_select %p210, %s16, 1
      %s212 = smul.addr %s211, 3
      %s213 = smul.addr %s212, 8
      %s214 = scalar_lea.vmem %s5, %s213
      %p215 = scmp.lt.s32.totalorder %s16, 1
      %s216 = scalar_select %p215, %s16, 1
      %s217 = smul.addr %s216, 4
      %s218 = smul.addr %s217, 8
      %s219 = scalar_lea.vmem %s0, %s218
      %p220 = scmp.lt.s32.totalorder %s16, 1
      %s221 = scalar_select %p220, %s16, 1
      %s222 = smul.addr %s221, 3
      %s223 = smul.addr %s222, 8
      %s224 = scalar_lea.vmem %s5, %s223
      %v226 = vld [vmem:[%s219] sm:$0xff]
      %v227 = vld [vmem:[%s219 + $0x8] sm:$0xff]
      %v228 = vld [vmem:[%s219 + $0x10] sm:$0xff]
      %v229 = vld [vmem:[%s219 + $0x18] sm:$0xf]
      %v230 = vpack.c.bf16 %v227, %v226
      %v231 = vpack.c.bf16 %v229, %v228
      %vm232 = vsmask.f32 7424
      %v234 = vshrl.u32 %v230, 16
      %v236 = vshll.u32 %v230, 16
      %v238 = vrot.slane %v236, 1
      %v239 = vor.u32 %v234, %v238
      %v241 = vshll.u32 %v231, 16
      %v243 = vrot.slane %v241, 1
      %v244 = vsel %vm232, %v239, %v243
      %v245 = vshrl.u32 %v231, 16
      %v247 = vor.u32 %v245, %v243
      %vm252 = vcmask 1046528
      %v253 = vrot.slane %v230, 1
      %v254 = vrot.slane %v231, 1
      %v255 = vsel %vm252, %v253, %v254
      %vm258 = vsmask.f32 6400
      %v259 = vrot.slane %v234, 1
      %v260 = vrot.slane %v236, 2
      %v261 = vor.u32 %v259, %v260
      %v262 = vrot.slane %v245, 1
      %v263 = vrot.slane %v241, 2
      %v264 = vor.u32 %v262, %v263
      %v265 = vsel %vm258, %v261, %v264
      %vm268 = vcmask 1045504
      %v269 = vrot.slane %v230, 2
      %v270 = vrot.slane %v231, 2
      %v271 = vsel %vm268, %v269, %v270
      %vm274 = vsmask.f32 5376
      %v275 = vrot.slane %v234, 2
      %v276 = vrot.slane %v236, 3
      %v277 = vor.u32 %v275, %v276
      %v278 = vrot.slane %v245, 2
      %v279 = vrot.slane %v241, 3
      %v280 = vor.u32 %v278, %v279
      %v281 = vsel %vm274, %v277, %v280
      %vm284 = vcmask 1044480
      %v285 = vrot.slane %v230, 3
      %v286 = vrot.slane %v231, 3
      %v287 = vsel %vm284, %v285, %v286
      %v290 = vld [vmem:[%s1] sm:$0xf]
      %v291 = vld [vmem:[%s1 + $0x4] sm:$0xf]
      %v292 = vld [vmem:[%s1 + $0x8] sm:$0xf]
      %v293 = vld [vmem:[%s1 + $0xc] sm:$0xf]
      %v294 = vld [vmem:[%s1 + $0x10] sm:$0xf]
      %v295 = vld [vmem:[%s1 + $0x14] sm:$0xf]
      %v296 = vld [vmem:[%s1 + $0x18] sm:$0xf]
      %v297 = vld [vmem:[%s1 + $0x1c] sm:$0xf]
      %v298 = vld [vmem:[%s1 + $0x20] sm:$0xf]
      %v299 = vld [vmem:[%s1 + $0x24] sm:$0xf]
      %v300 = vld [vmem:[%s1 + $0x28] sm:$0xf]
      %v301 = vld [vmem:[%s1 + $0x2c] sm:$0xf]
      %v302 = vld [vmem:[%s1 + $0x30] sm:$0xf]
      %v303 = vld [vmem:[%s1 + $0x34] sm:$0xf]
      %v304 = vld [vmem:[%s1 + $0x38] sm:$0xf]
      %v305 = vld [vmem:[%s1 + $0x3c] sm:$0xf]
      %v306 = vld [vmem:[%s1 + $0x40] sm:$0xf]
      %v307 = vld [vmem:[%s1 + $0x44] sm:$0xf]
      %v308 = vld [vmem:[%s1 + $0x48] sm:$0xf]
      %v309 = vld [vmem:[%s1 + $0x4c] sm:$0xf]
      %v310 = vld [vmem:[%s1 + $0x50] sm:$0xf]
      %v311 = vld [vmem:[%s1 + $0x54] sm:$0xf]
      %v312 = vld [vmem:[%s1 + $0x58] sm:$0xf]
      %v313 = vld [vmem:[%s1 + $0x5c] sm:$0xf]
      %v314 = vld [vmem:[%s1 + $0x60] sm:$0xf]
      %v315 = vld [vmem:[%s1 + $0x64] sm:$0xf]
      %v316 = vld [vmem:[%s1 + $0x68] sm:$0xf]
      %v317 = vld [vmem:[%s1 + $0x6c] sm:$0xf]
      %v318 = vld [vmem:[%s1 + $0x70] sm:$0xf]
      %v319 = vld [vmem:[%s1 + $0x74] sm:$0xf]
      %v320 = vld [vmem:[%s1 + $0x78] sm:$0xf]
      %v321 = vld [vmem:[%s1 + $0x7c] sm:$0xf]
      %v322 = vld [vmem:[%s1 + $0x80] sm:$0xf]
      %v323 = vld [vmem:[%s1 + $0x84] sm:$0xf]
      %v324 = vld [vmem:[%s1 + $0x88] sm:$0xf]
      %v325 = vld [vmem:[%s1 + $0x8c] sm:$0xf]
      %v326 = vld [vmem:[%s1 + $0x90] sm:$0xf]
      %v327 = vld [vmem:[%s1 + $0x94] sm:$0xf]
      %v328 = vld [vmem:[%s1 + $0x98] sm:$0xf]
      %v329 = vld [vmem:[%s1 + $0x9c] sm:$0xf]
      %v330 = vld [vmem:[%s1 + $0xa0] sm:$0xf]
      %v331 = vld [vmem:[%s1 + $0xa4] sm:$0xf]
      %v332 = vld [vmem:[%s1 + $0xa8] sm:$0xf]
      %v333 = vld [vmem:[%s1 + $0xac] sm:$0xf]
      %v334 = vld [vmem:[%s1 + $0xb0] sm:$0xf]
      %v335 = vld [vmem:[%s1 + $0xb4] sm:$0xf]
      %v336 = vld [vmem:[%s1 + $0xb8] sm:$0xf]
      %v337 = vld [vmem:[%s1 + $0xbc] sm:$0xf]
      %v338 = vld [vmem:[%s1 + $0xc0] sm:$0xf]
      %v339 = vld [vmem:[%s1 + $0xc4] sm:$0xf]
      %v340 = vld [vmem:[%s1 + $0xc8] sm:$0xf]
      %v341 = vld [vmem:[%s1 + $0xcc] sm:$0xf]
      %v342 = vld [vmem:[%s1 + $0xd0] sm:$0xf]
      %v343 = vld [vmem:[%s1 + $0xd4] sm:$0xf]
      %v344 = vld [vmem:[%s1 + $0xd8] sm:$0xf]
      %v345 = vld [vmem:[%s1 + $0xdc] sm:$0xf]
      %v346 = vld [vmem:[%s1 + $0xe0] sm:$0xf]
      %v347 = vld [vmem:[%s1 + $0xe4] sm:$0xf]
      %v348 = vld [vmem:[%s1 + $0xe8] sm:$0xf]
      %v349 = vld [vmem:[%s1 + $0xec] sm:$0xf]
      %v350 = vld [vmem:[%s1 + $0xf0] sm:$0xf]
      %v351 = vld [vmem:[%s1 + $0xf4] sm:$0xf]
      %v352 = vld [vmem:[%s1 + $0xf8] sm:$0xf]
      %v353 = vld [vmem:[%s1 + $0xfc] sm:$0xf]
      %v354 = vld [vmem:[%s1 + $0x100] sm:$0xf]
      %v355 = vld [vmem:[%s1 + $0x104] sm:$0xf]
      %v356 = vld [vmem:[%s1 + $0x108] sm:$0xf]
      %v357 = vld [vmem:[%s1 + $0x10c] sm:$0xf]
      %v358 = vld [vmem:[%s1 + $0x110] sm:$0xf]
      %v359 = vld [vmem:[%s1 + $0x114] sm:$0xf]
      %v360 = vld [vmem:[%s1 + $0x118] sm:$0xf]
      %v361 = vld [vmem:[%s1 + $0x11c] sm:$0xf]
      %v362 = vld [vmem:[%s1 + $0x120] sm:$0xf]
      %v363 = vld [vmem:[%s1 + $0x124] sm:$0xf]
      %v364 = vld [vmem:[%s1 + $0x128] sm:$0xf]
      %v365 = vld [vmem:[%s1 + $0x12c] sm:$0xf]
      %v366 = vld [vmem:[%s1 + $0x130] sm:$0xf]
      %v367 = vld [vmem:[%s1 + $0x134] sm:$0xf]
      %v368 = vld [vmem:[%s1 + $0x138] sm:$0xf]
      %v369 = vld [vmem:[%s1 + $0x13c] sm:$0xf]
      %v370 = vld [vmem:[%s1 + $0x140] sm:$0xf]
      %v371 = vld [vmem:[%s1 + $0x144] sm:$0xf]
      %v372 = vld [vmem:[%s1 + $0x148] sm:$0xf]
      %v373 = vld [vmem:[%s1 + $0x14c] sm:$0xf]
      %v374 = vld [vmem:[%s1 + $0x150] sm:$0xf]
      %v375 = vld [vmem:[%s1 + $0x154] sm:$0xf]
      %v376 = vld [vmem:[%s1 + $0x158] sm:$0xf]
      %v377 = vld [vmem:[%s1 + $0x15c] sm:$0xf]
      %v378 = vld [vmem:[%s1 + $0x160] sm:$0xf]
      %v379 = vld [vmem:[%s1 + $0x164] sm:$0xf]
      %v380 = vld [vmem:[%s1 + $0x168] sm:$0xf]
      %v381 = vld [vmem:[%s1 + $0x16c] sm:$0xf]
      %v382 = vld [vmem:[%s1 + $0x170] sm:$0xf]
      %v383 = vld [vmem:[%s1 + $0x174] sm:$0xf]
      %v384 = vld [vmem:[%s1 + $0x178] sm:$0xf]
      %v385 = vld [vmem:[%s1 + $0x17c] sm:$0xf]
      %v386 = vld [vmem:[%s1 + $0x180] sm:$0xf]
      %v387 = vld [vmem:[%s1 + $0x184] sm:$0xf]
      %v388 = vld [vmem:[%s1 + $0x188] sm:$0xf]
      %v389 = vld [vmem:[%s1 + $0x18c] sm:$0xf]
      %v390 = vld [vmem:[%s1 + $0x190] sm:$0xf]
      %v391 = vld [vmem:[%s1 + $0x194] sm:$0xf]
      %v392 = vld [vmem:[%s1 + $0x198] sm:$0xf]
      %v393 = vld [vmem:[%s1 + $0x19c] sm:$0xf]
      %v394 = vld [vmem:[%s1 + $0x1a0] sm:$0xf]
      %v395 = vld [vmem:[%s1 + $0x1a4] sm:$0xf]
      %v396 = vld [vmem:[%s1 + $0x1a8] sm:$0xf]
      %v397 = vld [vmem:[%s1 + $0x1ac] sm:$0xf]
      %v398 = vld [vmem:[%s1 + $0x1b0] sm:$0xf]
      %v399 = vld [vmem:[%s1 + $0x1b4] sm:$0xf]
      %v400 = vld [vmem:[%s1 + $0x1b8] sm:$0xf]
      %v401 = vld [vmem:[%s1 + $0x1bc] sm:$0xf]
      %v402 = vld [vmem:[%s2] sm:$0x1]
      %v404 = vlaneseq
      %v405 = vshrl.u32 %v404, 7
      %v406 = vsub.s32 0, %v405
      %v407 = vrot.slane %v402, %v406
      %v521 = vunpack.c.l.b16 %v290
      %v522 = vunpack.c.l.b16 %v291
      %v523 = vunpack.c.l.b16 %v292
      %v524 = vunpack.c.l.b16 %v293
      %v525 = vunpack.c.l.b16 %v294
      %v526 = vunpack.c.l.b16 %v295
      %v527 = vunpack.c.l.b16 %v296
      %v528 = vunpack.c.l.b16 %v297
      %v529 = vunpack.c.l.b16 %v298
      %v530 = vunpack.c.l.b16 %v299
      %v531 = vunpack.c.l.b16 %v300
      %v532 = vunpack.c.l.b16 %v301
      %v533 = vunpack.c.l.b16 %v302
      %v534 = vunpack.c.l.b16 %v303
      %v535 = vunpack.c.l.b16 %v304
      %v536 = vunpack.c.l.b16 %v305
      %v537 = vunpack.c.l.b16 %v306
      %v538 = vunpack.c.l.b16 %v307
      %v539 = vunpack.c.l.b16 %v308
      %v540 = vunpack.c.l.b16 %v309
      %v541 = vunpack.c.l.b16 %v310
      %v542 = vunpack.c.l.b16 %v311
      %v543 = vunpack.c.l.b16 %v312
      %v544 = vunpack.c.l.b16 %v313
      %v545 = vunpack.c.l.b16 %v314
      %v546 = vunpack.c.l.b16 %v315
      %v547 = vunpack.c.l.b16 %v316
      %v548 = vunpack.c.l.b16 %v317
      %v549 = vunpack.c.l.b16 %v318
      %v550 = vunpack.c.l.b16 %v319
      %v551 = vunpack.c.l.b16 %v320
      %v552 = vunpack.c.l.b16 %v321
      %v553 = vunpack.c.l.b16 %v322
      %v554 = vunpack.c.l.b16 %v323
      %v555 = vunpack.c.l.b16 %v324
      %v556 = vunpack.c.l.b16 %v325
      %v557 = vunpack.c.l.b16 %v326
      %v558 = vunpack.c.l.b16 %v327
      %v559 = vunpack.c.l.b16 %v328
      %v560 = vunpack.c.l.b16 %v329
      %v561 = vunpack.c.l.b16 %v330
      %v562 = vunpack.c.l.b16 %v331
      %v563 = vunpack.c.l.b16 %v332
      %v564 = vunpack.c.l.b16 %v333
      %v565 = vunpack.c.l.b16 %v334
      %v566 = vunpack.c.l.b16 %v335
      %v567 = vunpack.c.l.b16 %v336
      %v568 = vunpack.c.l.b16 %v337
      %v569 = vunpack.c.l.b16 %v338
      %v570 = vunpack.c.l.b16 %v339
      %v571 = vunpack.c.l.b16 %v340
      %v572 = vunpack.c.l.b16 %v341
      %v573 = vunpack.c.l.b16 %v342
      %v574 = vunpack.c.l.b16 %v343
      %v575 = vunpack.c.l.b16 %v344
      %v576 = vunpack.c.l.b16 %v345
      %v577 = vunpack.c.l.b16 %v346
      %v578 = vunpack.c.l.b16 %v347
      %v579 = vunpack.c.l.b16 %v348
      %v580 = vunpack.c.l.b16 %v349
      %v581 = vunpack.c.l.b16 %v350
      %v582 = vunpack.c.l.b16 %v351
      %v583 = vunpack.c.l.b16 %v352
      %v584 = vunpack.c.l.b16 %v353
      %v585 = vunpack.c.l.b16 %v354
      %v586 = vunpack.c.l.b16 %v355
      %v587 = vunpack.c.l.b16 %v356
      %v588 = vunpack.c.l.b16 %v357
      %v589 = vunpack.c.l.b16 %v358
      %v590 = vunpack.c.l.b16 %v359
      %v591 = vunpack.c.l.b16 %v360
      %v592 = vunpack.c.l.b16 %v361
      %v593 = vunpack.c.l.b16 %v362
      %v594 = vunpack.c.l.b16 %v363
      %v595 = vunpack.c.l.b16 %v364
      %v596 = vunpack.c.l.b16 %v365
      %v597 = vunpack.c.l.b16 %v366
      %v598 = vunpack.c.l.b16 %v367
      %v599 = vunpack.c.l.b16 %v368
      %v600 = vunpack.c.l.b16 %v369
      %v601 = vunpack.c.l.b16 %v370
      %v602 = vunpack.c.l.b16 %v371
      %v603 = vunpack.c.l.b16 %v372
      %v604 = vunpack.c.l.b16 %v373
      %v605 = vunpack.c.l.b16 %v374
      %v606 = vunpack.c.l.b16 %v375
      %v607 = vunpack.c.l.b16 %v376
      %v608 = vunpack.c.l.b16 %v377
      %v609 = vunpack.c.l.b16 %v378
      %v610 = vunpack.c.l.b16 %v379
      %v611 = vunpack.c.l.b16 %v380
      %v612 = vunpack.c.l.b16 %v381
      %v613 = vunpack.c.l.b16 %v382
      %v614 = vunpack.c.l.b16 %v383
      %v615 = vunpack.c.l.b16 %v384
      %v616 = vunpack.c.l.b16 %v385
      %v617 = vunpack.c.l.b16 %v386
      %v618 = vunpack.c.l.b16 %v387
      %v619 = vunpack.c.l.b16 %v388
      %v620 = vunpack.c.l.b16 %v389
      %v621 = vunpack.c.l.b16 %v390
      %v622 = vunpack.c.l.b16 %v391
      %v623 = vunpack.c.l.b16 %v392
      %v624 = vunpack.c.l.b16 %v393
      %v625 = vunpack.c.l.b16 %v394
      %v626 = vunpack.c.l.b16 %v395
      %v627 = vunpack.c.l.b16 %v396
      %v628 = vunpack.c.l.b16 %v397
      %v629 = vunpack.c.l.b16 %v398
      %v630 = vunpack.c.l.b16 %v399
      %v631 = vunpack.c.l.b16 %v400
      %v632 = vunpack.c.l.b16 %v401
      %v633 = vpack.c.b16 %v522, %v521
      %v634 = vpack.c.b16 %v524, %v523
      %v635 = vpack.c.b16 %v526, %v525
      %v636 = vpack.c.b16 %v528, %v527
      %v637 = vpack.c.b16 %v530, %v529
      %v638 = vpack.c.b16 %v532, %v531
      %v639 = vpack.c.b16 %v534, %v533
      %v640 = vpack.c.b16 %v536, %v535
      %v641 = vpack.c.b16 %v538, %v537
      %v642 = vpack.c.b16 %v540, %v539
      %v643 = vpack.c.b16 %v542, %v541
      %v644 = vpack.c.b16 %v544, %v543
      %v645 = vpack.c.b16 %v546, %v545
      %v646 = vpack.c.b16 %v548, %v547
      %v647 = vpack.c.b16 %v550, %v549
      %v648 = vpack.c.b16 %v552, %v551
      %v649 = vpack.c.b16 %v554, %v553
      %v650 = vpack.c.b16 %v556, %v555
      %v651 = vpack.c.b16 %v558, %v557
      %v652 = vpack.c.b16 %v560, %v559
      %v653 = vpack.c.b16 %v562, %v561
      %v654 = vpack.c.b16 %v564, %v563
      %v655 = vpack.c.b16 %v566, %v565
      %v656 = vpack.c.b16 %v568, %v567
      %v657 = vpack.c.b16 %v570, %v569
      %v658 = vpack.c.b16 %v572, %v571
      %v659 = vpack.c.b16 %v574, %v573
      %v660 = vpack.c.b16 %v576, %v575
      %v661 = vpack.c.b16 %v578, %v577
      %v662 = vpack.c.b16 %v580, %v579
      %v663 = vpack.c.b16 %v582, %v581
      %v664 = vpack.c.b16 %v584, %v583
      %v665 = vpack.c.b16 %v586, %v585
      %v666 = vpack.c.b16 %v588, %v587
      %v667 = vpack.c.b16 %v590, %v589
      %v668 = vpack.c.b16 %v592, %v591
      %v669 = vpack.c.b16 %v594, %v593
      %v670 = vpack.c.b16 %v596, %v595
      %v671 = vpack.c.b16 %v598, %v597
      %v672 = vpack.c.b16 %v600, %v599
      %v673 = vpack.c.b16 %v602, %v601
      %v674 = vpack.c.b16 %v604, %v603
      %v675 = vpack.c.b16 %v606, %v605
      %v676 = vpack.c.b16 %v608, %v607
      %v677 = vpack.c.b16 %v610, %v609
      %v678 = vpack.c.b16 %v612, %v611
      %v679 = vpack.c.b16 %v614, %v613
      %v680 = vpack.c.b16 %v616, %v615
      %v681 = vpack.c.b16 %v618, %v617
      %v682 = vpack.c.b16 %v620, %v619
      %v683 = vpack.c.b16 %v622, %v621
      %v684 = vpack.c.b16 %v624, %v623
      %v685 = vpack.c.b16 %v626, %v625
      %v686 = vpack.c.b16 %v628, %v627
      %v687 = vpack.c.b16 %v630, %v629
      %v688 = vpack.c.b16 %v632, %v631
      %745 = vmatprep.subr.bf16.mxu0 0
      %746 = vmatpush1.bf16.msra.mxu0 %v640
      %747 = vmatprep.subr.bf16.mxu0 0
      %748 = vmatpush1.bf16.msra.mxu0 %v639
      %749 = vmatprep.subr.bf16.mxu0 0
      %750 = vmatpush1.bf16.msra.mxu0 %v638
      %751 = vmatprep.subr.bf16.mxu0 0
      %752 = vmatpush1.bf16.msra.mxu0 %v637
      %753 = vmatprep.subr.bf16.mxu0 0
      %754 = vmatpush1.bf16.msra.mxu0 %v636
      %755 = vmatprep.subr.bf16.mxu0 0
      %756 = vmatpush1.bf16.msra.mxu0 %v635
      %757 = vmatprep.subr.bf16.mxu0 0
      %758 = vmatpush1.bf16.msra.mxu0 %v634
      %759 = vmatprep.subr.bf16.mxu0 0
      %760 = vmatpush1.bf16.msra.mxu0 %v633
      %761 = vmatprep.subr.bf16.mxu0 0
      %762 = vmatpush2.bf16.msra.mxu0 %v648
      %763 = vmatprep.subr.bf16.mxu0 0
      %764 = vmatpush2.bf16.msra.mxu0 %v647
      %765 = vmatprep.subr.bf16.mxu0 0
      %766 = vmatpush2.bf16.msra.mxu0 %v646
      %767 = vmatprep.subr.bf16.mxu0 0
      %768 = vmatpush2.bf16.msra.mxu0 %v645
      %769 = vmatprep.subr.bf16.mxu0 0
      %770 = vmatpush2.bf16.msra.mxu0 %v644
      %771 = vmatprep.subr.bf16.mxu0 0
      %772 = vmatpush2.bf16.msra.mxu0 %v643
      %773 = vmatprep.subr.bf16.mxu0 0
      %774 = vmatpush2.bf16.msra.mxu0 %v642
      %775 = vmatprep.subr.bf16.mxu0 0
      %776 = vmatpush2.bf16.msra.mxu0 %v641
      %777 = vmatprep.mubr.bf16.mxu0 %v244
      %778 = vmatmul.mubr.bf16.gmra.mxu0 %v230
      %v779 = vpop.f32.mrf.mxu0
      %v780 = vadd.f32 %v407, %v779
      %v781 = vpop.f32.mrf.mxu0
      %v782 = vpop.f32.mrf.mxu0
      %v783 = vadd.f32 %v407, %v782
      %v784 = vpop.f32.mrf.mxu0
      %785 = vmatprep.mubr.bf16.mxu0 %v247
      %786 = vmatmul.mubr.bf16.gmra.mxu0 %v231
      %v787 = vpop.f32.mrf.mxu0
      %v788 = vadd.f32 %v407, %v787
      %v789 = vpop.f32.mrf.mxu0
      %v790 = vpop.f32.mrf.mxu0
      %v791 = vpop.f32.mrf.mxu0
      %792 = vdwg.mxu0
      %793 = vmatprep.subr.bf16.mxu0 0
      %794 = vmatpush1.bf16.msra.mxu0 %v656
      %795 = vmatprep.subr.bf16.mxu0 0
      %796 = vmatpush1.bf16.msra.mxu0 %v655
      %797 = vmatprep.subr.bf16.mxu0 0
      %798 = vmatpush1.bf16.msra.mxu0 %v654
      %799 = vmatprep.subr.bf16.mxu0 0
      %800 = vmatpush1.bf16.msra.mxu0 %v653
      %801 = vmatprep.subr.bf16.mxu0 0
      %802 = vmatpush1.bf16.msra.mxu0 %v652
      %803 = vmatprep.subr.bf16.mxu0 0
      %804 = vmatpush1.bf16.msra.mxu0 %v651
      %805 = vmatprep.subr.bf16.mxu0 0
      %806 = vmatpush1.bf16.msra.mxu0 %v650
      %807 = vmatprep.subr.bf16.mxu0 0
      %808 = vmatpush1.bf16.msra.mxu0 %v649
      %809 = vmatprep.subr.bf16.mxu0 0
      %810 = vmatpush2.bf16.msra.mxu0 %v664
      %811 = vmatprep.subr.bf16.mxu0 0
      %812 = vmatpush2.bf16.msra.mxu0 %v663
      %813 = vmatprep.subr.bf16.mxu0 0
      %814 = vmatpush2.bf16.msra.mxu0 %v662
      %815 = vmatprep.subr.bf16.mxu0 0
      %816 = vmatpush2.bf16.msra.mxu0 %v661
      %817 = vmatprep.subr.bf16.mxu0 0
      %818 = vmatpush2.bf16.msra.mxu0 %v660
      %819 = vmatprep.subr.bf16.mxu0 0
      %820 = vmatpush2.bf16.msra.mxu0 %v659
      %821 = vmatprep.subr.bf16.mxu0 0
      %822 = vmatpush2.bf16.msra.mxu0 %v658
      %823 = vmatprep.subr.bf16.mxu0 0
      %824 = vmatpush2.bf16.msra.mxu0 %v657
      %825 = vmatprep.mubr.bf16.mxu0 %v265
      %826 = vmatmul.mubr.bf16.gmra.mxu0 %v255
      %v827 = vpop.f32.mrf.mxu0
      %v828 = vadd.f32 %v780, %v827
      %v829 = vpop.f32.mrf.mxu0
      %v830 = vpop.f32.mrf.mxu0
      %v831 = vadd.f32 %v783, %v830
      %v832 = vpop.f32.mrf.mxu0
      %833 = vmatprep.mubr.bf16.mxu0 %v264
      %834 = vmatmul.mubr.bf16.gmra.mxu0 %v254
      %v835 = vpop.f32.mrf.mxu0
      %v836 = vadd.f32 %v788, %v835
      %v837 = vpop.f32.mrf.mxu0
      %v838 = vpop.f32.mrf.mxu0
      %v839 = vpop.f32.mrf.mxu0
      %840 = vdwg.mxu0
      %841 = vmatprep.subr.bf16.mxu0 0
      %842 = vmatpush1.bf16.msra.mxu0 %v672
      %843 = vmatprep.subr.bf16.mxu0 0
      %844 = vmatpush1.bf16.msra.mxu0 %v671
      %845 = vmatprep.subr.bf16.mxu0 0
      %846 = vmatpush1.bf16.msra.mxu0 %v670
      %847 = vmatprep.subr.bf16.mxu0 0
      %848 = vmatpush1.bf16.msra.mxu0 %v669
      %849 = vmatprep.subr.bf16.mxu0 0
      %850 = vmatpush1.bf16.msra.mxu0 %v668
      %851 = vmatprep.subr.bf16.mxu0 0
      %852 = vmatpush1.bf16.msra.mxu0 %v667
      %853 = vmatprep.subr.bf16.mxu0 0
      %854 = vmatpush1.bf16.msra.mxu0 %v666
      %855 = vmatprep.subr.bf16.mxu0 0
      %856 = vmatpush1.bf16.msra.mxu0 %v665
      %857 = vmatprep.subr.bf16.mxu0 0
      %858 = vmatpush2.bf16.msra.mxu0 %v680
      %859 = vmatprep.subr.bf16.mxu0 0
      %860 = vmatpush2.bf16.msra.mxu0 %v679
      %861 = vmatprep.subr.bf16.mxu0 0
      %862 = vmatpush2.bf16.msra.mxu0 %v678
      %863 = vmatprep.subr.bf16.mxu0 0
      %864 = vmatpush2.bf16.msra.mxu0 %v677
      %865 = vmatprep.subr.bf16.mxu0 0
      %866 = vmatpush2.bf16.msra.mxu0 %v676
      %867 = vmatprep.subr.bf16.mxu0 0
      %868 = vmatpush2.bf16.msra.mxu0 %v675
      %869 = vmatprep.subr.bf16.mxu0 0
      %870 = vmatpush2.bf16.msra.mxu0 %v674
      %871 = vmatprep.subr.bf16.mxu0 0
      %872 = vmatpush2.bf16.msra.mxu0 %v673
      %873 = vmatprep.mubr.bf16.mxu0 %v281
      %874 = vmatmul.mubr.bf16.gmra.mxu0 %v271
      %v875 = vpop.f32.mrf.mxu0
      %v876 = vadd.f32 %v828, %v875
      %v877 = vpop.f32.mrf.mxu0
      %v878 = vpop.f32.mrf.mxu0
      %v879 = vadd.f32 %v831, %v878
      %v880 = vpop.f32.mrf.mxu0
      %881 = vmatprep.mubr.bf16.mxu0 %v280
      %882 = vmatmul.mubr.bf16.gmra.mxu0 %v270
      %v883 = vpop.f32.mrf.mxu0
      %v884 = vadd.f32 %v836, %v883
      %v885 = vpop.f32.mrf.mxu0
      %v886 = vpop.f32.mrf.mxu0
      %v887 = vpop.f32.mrf.mxu0
      %888 = vdwg.mxu0
      %889 = vmatprep.subr.bf16.mxu0 0
      %890 = vmatpush1.bf16.msra.mxu0 %v688
      %891 = vmatprep.subr.bf16.mxu0 0
      %892 = vmatpush1.bf16.msra.mxu0 %v687
      %893 = vmatprep.subr.bf16.mxu0 0
      %894 = vmatpush1.bf16.msra.mxu0 %v686
      %895 = vmatprep.subr.bf16.mxu0 0
      %896 = vmatpush1.bf16.msra.mxu0 %v685
      %897 = vmatprep.subr.bf16.mxu0 0
      %898 = vmatpush1.bf16.msra.mxu0 %v684
      %899 = vmatprep.subr.bf16.mxu0 0
      %900 = vmatpush1.bf16.msra.mxu0 %v683
      %901 = vmatprep.subr.bf16.mxu0 0
      %902 = vmatpush1.bf16.msra.mxu0 %v682
      %903 = vmatprep.subr.bf16.mxu0 0
      %904 = vmatpush1.bf16.msra.mxu0 %v681
      %905 = vmatprep.subr.bf16.mxu0 0
      %906 = vmatpush2.bf16.msra.mxu0 0
      %907 = vmatprep.subr.bf16.mxu0 0
      %908 = vmatpush2.bf16.msra.mxu0 0
      %909 = vmatprep.subr.bf16.mxu0 0
      %910 = vmatpush2.bf16.msra.mxu0 0
      %911 = vmatprep.subr.bf16.mxu0 0
      %912 = vmatpush2.bf16.msra.mxu0 0
      %913 = vmatprep.subr.bf16.mxu0 0
      %914 = vmatpush2.bf16.msra.mxu0 0
      %915 = vmatprep.subr.bf16.mxu0 0
      %916 = vmatpush2.bf16.msra.mxu0 0
      %917 = vmatprep.subr.bf16.mxu0 0
      %918 = vmatpush2.bf16.msra.mxu0 0
      %919 = vmatprep.subr.bf16.mxu0 0
      %920 = vmatpush2.bf16.msra.mxu0 0
      %921 = vmatprep.mubr.bf16.mxu0 0
      %922 = vmatmul.mubr.bf16.gmra.mxu0 %v287
      %v923 = vpop.f32.mrf.mxu0
      %v924 = vadd.f32 %v876, %v923
      %v925 = vpop.f32.mrf.mxu0
      %v926 = vpop.f32.mrf.mxu0
      %v927 = vadd.f32 %v879, %v926
      %v928 = vpop.f32.mrf.mxu0
      %929 = vmatprep.mubr.bf16.mxu0 0
      %930 = vmatmul.mubr.bf16.gmra.mxu0 %v286
      %v931 = vpop.f32.mrf.mxu0
      %v932 = vadd.f32 %v884, %v931
      %v933 = vpop.f32.mrf.mxu0
      %v934 = vpop.f32.mrf.mxu0
      %v935 = vpop.f32.mrf.mxu0
      %936 = vdwg.mxu0
      %v937 = vmax.f32 %v924, 0.0
      %v938 = vmax.f32 %v927, 0.0
      %v939 = vmax.f32 %v932, 0.0
      %v940 = vlaneseq
      %v941 = vshrl.u32 %v940, 7
      %v942 = vadd.s32 %v941, 8
      %v943 = vadd.s32 %v941, 16
      %vm944 = vcmp.lt.s32.totalorder %v941, 0
      %v945 = vsub.s32 0, %v941
      %v946 = vsel %vm944, %v945, %v941
      %v947 = vmul.u32.u64.compose %v946, 3123612579
      %v948 = vextract.low.u32 %v947
      %v949 = vextract.high.u32 %v947
      %v950 = vshrl.u32 %v949, 4
      %v951 = vmul.u32 %v950, 22
      %v952 = vsub.s32 %v946, %v951
      %v953 = vsub.s32 0, %v952
      %v954 = vsel %vm944, %v953, %v952
      %vm955 = vcmp.lt.s32.totalorder %v942, 0
      %v956 = vsub.s32 0, %v942
      %v957 = vsel %vm955, %v956, %v942
      %v958 = vmul.u32.u64.compose %v957, 3123612579
      %v959 = vextract.low.u32 %v958
      %v960 = vextract.high.u32 %v958
      %v961 = vshrl.u32 %v960, 4
      %v962 = vmul.u32 %v961, 22
      %v963 = vsub.s32 %v957, %v962
      %v964 = vsub.s32 0, %v963
      %v965 = vsel %vm955, %v964, %v963
      %vm966 = vcmp.lt.s32.totalorder %v943, 0
      %v967 = vsub.s32 0, %v943
      %v968 = vsel %vm966, %v967, %v943
      %v969 = vmul.u32.u64.compose %v968, 3123612579
      %v970 = vextract.low.u32 %v969
      %v971 = vextract.high.u32 %v969
      %v972 = vshrl.u32 %v971, 4
      %v973 = vmul.u32 %v972, 22
      %v974 = vsub.s32 %v968, %v973
      %v975 = vsub.s32 0, %v974
      %v976 = vsel %vm966, %v975, %v974
      %vm977 = vcmp.ne.s32.totalorder %v954, 0
      %vm978 = vcmp.ne.s32.totalorder %v965, 0
      %vm979 = vcmp.ne.s32.totalorder %v976, 0
      %vm980 = vcmp.lt.s32.totalorder %v954, 0
      %vm981 = vcmp.lt.s32.totalorder %v965, 0
      %vm982 = vcmp.lt.s32.totalorder %v976, 0
      %vm983 = vmand %vm980, %vm977
      %vm984 = vmand %vm981, %vm978
      %vm985 = vmand %vm982, %vm979
      %v986 = vadd.s32 %v954, 22
      %v987 = vadd.s32 %v965, 22
      %v988 = vadd.s32 %v976, 22
      %v989 = vsel %vm983, %v986, %v954
      %v990 = vsel %vm984, %v987, %v965
      %v991 = vsel %vm985, %v988, %v976
      %vm992 = vcmp.ge.s32.totalorder %v989, 3
      %vm993 = vcmp.ge.s32.totalorder %v990, 3
      %vm994 = vcmp.ge.s32.totalorder %v991, 3
      %vm995 = vcmp.lt.s32.totalorder %v989, 19
      %vm996 = vcmp.lt.s32.totalorder %v990, 19
      %vm997 = vcmp.lt.s32.totalorder %v991, 19
      %vm998 = vmand %vm992, %vm995
      %vm999 = vmand %vm993, %vm996
      %vm1000 = vmand %vm994, %vm997
      %v1001 = vsel %vm998, 1, 0
      %v1002 = vsel %vm999, 1, 0
      %v1003 = vsel %vm1000, 1, 0
      %vm1004 = vcmp.eq.s32.totalorder %v1001, 1
      %vm1005 = vcmp.eq.s32.totalorder %v1002, 1
      %vm1006 = vcmp.eq.s32.totalorder %v1003, 1
      %v1007 = vsel %vm1004, %v937, 0.0
      %v1008 = vsel %vm1005, %v938, 0.0
      %v1009 = vsel %vm1006, %v939, 0.0
      %v1010 = vpack.c.bf16 %v1008, %v1007
      %v1011 = vpack.c.bf16 %v1009, %v1009
      %v1013 = vshrl.u32 %v1010, 16
      %v1015 = vshll.u32 %v1010, 16
      %v1017 = vrot.slane %v1015, 1
      %v1018 = vor.u32 %v1013, %v1017
      %v1020 = vshll.u32 %v1011, 16
      %v1022 = vrot.slane %v1020, 1
      %v1023 = vsel %vm232, %v1018, %v1022
      %v1027 = vrot.slane %v1010, 1
      %v1028 = vrot.slane %v1011, 1
      %v1029 = vsel %vm252, %v1027, %v1028
      %v1031 = vrot.slane %v1013, 1
      %v1032 = vrot.slane %v1015, 2
      %v1033 = vor.u32 %v1031, %v1032
      %v1034 = vshrl.u32 %v1011, 16
      %v1036 = vrot.slane %v1034, 1
      %v1037 = vrot.slane %v1020, 2
      %v1038 = vor.u32 %v1036, %v1037
      %v1039 = vsel %vm258, %v1033, %v1038
      %v1041 = vrot.slane %v1010, 2
      %v1042 = vrot.slane %v1011, 2
      %v1043 = vsel %vm268, %v1041, %v1042
      %v1045 = vrot.slane %v1013, 2
      %v1046 = vrot.slane %v1015, 3
      %v1047 = vor.u32 %v1045, %v1046
      %v1048 = vrot.slane %v1034, 2
      %v1049 = vrot.slane %v1020, 3
      %v1050 = vor.u32 %v1048, %v1049
      %v1051 = vsel %vm274, %v1047, %v1050
      %v1053 = vrot.slane %v1010, 3
      %v1054 = vrot.slane %v1011, 3
      %v1055 = vsel %vm284, %v1053, %v1054
      %v1057 = vld [vmem:[%s3] sm:$0xf]
      %v1058 = vld [vmem:[%s3 + $0x4] sm:$0xf]
      %v1059 = vld [vmem:[%s3 + $0x8] sm:$0xf]
      %v1060 = vld [vmem:[%s3 + $0xc] sm:$0xf]
      %v1061 = vld [vmem:[%s3 + $0x10] sm:$0xf]
      %v1062 = vld [vmem:[%s3 + $0x14] sm:$0xf]
      %v1063 = vld [vmem:[%s3 + $0x18] sm:$0xf]
      %v1064 = vld [vmem:[%s3 + $0x1c] sm:$0xf]
      %v1065 = vld [vmem:[%s3 + $0x20] sm:$0xf]
      %v1066 = vld [vmem:[%s3 + $0x24] sm:$0xf]
      %v1067 = vld [vmem:[%s3 + $0x28] sm:$0xf]
      %v1068 = vld [vmem:[%s3 + $0x2c] sm:$0xf]
      %v1069 = vld [vmem:[%s3 + $0x30] sm:$0xf]
      %v1070 = vld [vmem:[%s3 + $0x34] sm:$0xf]
      %v1071 = vld [vmem:[%s3 + $0x38] sm:$0xf]
      %v1072 = vld [vmem:[%s3 + $0x3c] sm:$0xf]
      %v1073 = vld [vmem:[%s3 + $0x40] sm:$0xf]
      %v1074 = vld [vmem:[%s3 + $0x44] sm:$0xf]
      %v1075 = vld [vmem:[%s3 + $0x48] sm:$0xf]
      %v1076 = vld [vmem:[%s3 + $0x4c] sm:$0xf]
      %v1077 = vld [vmem:[%s3 + $0x50] sm:$0xf]
      %v1078 = vld [vmem:[%s3 + $0x54] sm:$0xf]
      %v1079 = vld [vmem:[%s3 + $0x58] sm:$0xf]
      %v1080 = vld [vmem:[%s3 + $0x5c] sm:$0xf]
      %v1081 = vld [vmem:[%s3 + $0x60] sm:$0xf]
      %v1082 = vld [vmem:[%s3 + $0x64] sm:$0xf]
      %v1083 = vld [vmem:[%s3 + $0x68] sm:$0xf]
      %v1084 = vld [vmem:[%s3 + $0x6c] sm:$0xf]
      %v1085 = vld [vmem:[%s3 + $0x70] sm:$0xf]
      %v1086 = vld [vmem:[%s3 + $0x74] sm:$0xf]
      %v1087 = vld [vmem:[%s3 + $0x78] sm:$0xf]
      %v1088 = vld [vmem:[%s3 + $0x7c] sm:$0xf]
      %v1089 = vld [vmem:[%s3 + $0x80] sm:$0xf]
      %v1090 = vld [vmem:[%s3 + $0x84] sm:$0xf]
      %v1091 = vld [vmem:[%s3 + $0x88] sm:$0xf]
      %v1092 = vld [vmem:[%s3 + $0x8c] sm:$0xf]
      %v1093 = vld [vmem:[%s3 + $0x90] sm:$0xf]
      %v1094 = vld [vmem:[%s3 + $0x94] sm:$0xf]
      %v1095 = vld [vmem:[%s3 + $0x98] sm:$0xf]
      %v1096 = vld [vmem:[%s3 + $0x9c] sm:$0xf]
      %v1097 = vld [vmem:[%s3 + $0xa0] sm:$0xf]
      %v1098 = vld [vmem:[%s3 + $0xa4] sm:$0xf]
      %v1099 = vld [vmem:[%s3 + $0xa8] sm:$0xf]
      %v1100 = vld [vmem:[%s3 + $0xac] sm:$0xf]
      %v1101 = vld [vmem:[%s3 + $0xb0] sm:$0xf]
      %v1102 = vld [vmem:[%s3 + $0xb4] sm:$0xf]
      %v1103 = vld [vmem:[%s3 + $0xb8] sm:$0xf]
      %v1104 = vld [vmem:[%s3 + $0xbc] sm:$0xf]
      %v1105 = vld [vmem:[%s3 + $0xc0] sm:$0xf]
      %v1106 = vld [vmem:[%s3 + $0xc4] sm:$0xf]
      %v1107 = vld [vmem:[%s3 + $0xc8] sm:$0xf]
      %v1108 = vld [vmem:[%s3 + $0xcc] sm:$0xf]
      %v1109 = vld [vmem:[%s3 + $0xd0] sm:$0xf]
      %v1110 = vld [vmem:[%s3 + $0xd4] sm:$0xf]
      %v1111 = vld [vmem:[%s3 + $0xd8] sm:$0xf]
      %v1112 = vld [vmem:[%s3 + $0xdc] sm:$0xf]
      %v1113 = vld [vmem:[%s3 + $0xe0] sm:$0xf]
      %v1114 = vld [vmem:[%s3 + $0xe4] sm:$0xf]
      %v1115 = vld [vmem:[%s3 + $0xe8] sm:$0xf]
      %v1116 = vld [vmem:[%s3 + $0xec] sm:$0xf]
      %v1117 = vld [vmem:[%s3 + $0xf0] sm:$0xf]
      %v1118 = vld [vmem:[%s3 + $0xf4] sm:$0xf]
      %v1119 = vld [vmem:[%s3 + $0xf8] sm:$0xf]
      %v1120 = vld [vmem:[%s3 + $0xfc] sm:$0xf]
      %v1121 = vld [vmem:[%s3 + $0x100] sm:$0xf]
      %v1122 = vld [vmem:[%s3 + $0x104] sm:$0xf]
      %v1123 = vld [vmem:[%s3 + $0x108] sm:$0xf]
      %v1124 = vld [vmem:[%s3 + $0x10c] sm:$0xf]
      %v1125 = vld [vmem:[%s3 + $0x110] sm:$0xf]
      %v1126 = vld [vmem:[%s3 + $0x114] sm:$0xf]
      %v1127 = vld [vmem:[%s3 + $0x118] sm:$0xf]
      %v1128 = vld [vmem:[%s3 + $0x11c] sm:$0xf]
      %v1129 = vld [vmem:[%s3 + $0x120] sm:$0xf]
      %v1130 = vld [vmem:[%s3 + $0x124] sm:$0xf]
      %v1131 = vld [vmem:[%s3 + $0x128] sm:$0xf]
      %v1132 = vld [vmem:[%s3 + $0x12c] sm:$0xf]
      %v1133 = vld [vmem:[%s3 + $0x130] sm:$0xf]
      %v1134 = vld [vmem:[%s3 + $0x134] sm:$0xf]
      %v1135 = vld [vmem:[%s3 + $0x138] sm:$0xf]
      %v1136 = vld [vmem:[%s3 + $0x13c] sm:$0xf]
      %v1137 = vld [vmem:[%s3 + $0x140] sm:$0xf]
      %v1138 = vld [vmem:[%s3 + $0x144] sm:$0xf]
      %v1139 = vld [vmem:[%s3 + $0x148] sm:$0xf]
      %v1140 = vld [vmem:[%s3 + $0x14c] sm:$0xf]
      %v1141 = vld [vmem:[%s3 + $0x150] sm:$0xf]
      %v1142 = vld [vmem:[%s3 + $0x154] sm:$0xf]
      %v1143 = vld [vmem:[%s3 + $0x158] sm:$0xf]
      %v1144 = vld [vmem:[%s3 + $0x15c] sm:$0xf]
      %v1145 = vld [vmem:[%s3 + $0x160] sm:$0xf]
      %v1146 = vld [vmem:[%s3 + $0x164] sm:$0xf]
      %v1147 = vld [vmem:[%s3 + $0x168] sm:$0xf]
      %v1148 = vld [vmem:[%s3 + $0x16c] sm:$0xf]
      %v1149 = vld [vmem:[%s3 + $0x170] sm:$0xf]
      %v1150 = vld [vmem:[%s3 + $0x174] sm:$0xf]
      %v1151 = vld [vmem:[%s3 + $0x178] sm:$0xf]
      %v1152 = vld [vmem:[%s3 + $0x17c] sm:$0xf]
      %v1153 = vld [vmem:[%s3 + $0x180] sm:$0xf]
      %v1154 = vld [vmem:[%s3 + $0x184] sm:$0xf]
      %v1155 = vld [vmem:[%s3 + $0x188] sm:$0xf]
      %v1156 = vld [vmem:[%s3 + $0x18c] sm:$0xf]
      %v1157 = vld [vmem:[%s3 + $0x190] sm:$0xf]
      %v1158 = vld [vmem:[%s3 + $0x194] sm:$0xf]
      %v1159 = vld [vmem:[%s3 + $0x198] sm:$0xf]
      %v1160 = vld [vmem:[%s3 + $0x19c] sm:$0xf]
      %v1161 = vld [vmem:[%s3 + $0x1a0] sm:$0xf]
      %v1162 = vld [vmem:[%s3 + $0x1a4] sm:$0xf]
      %v1163 = vld [vmem:[%s3 + $0x1a8] sm:$0xf]
      %v1164 = vld [vmem:[%s3 + $0x1ac] sm:$0xf]
      %v1165 = vld [vmem:[%s3 + $0x1b0] sm:$0xf]
      %v1166 = vld [vmem:[%s3 + $0x1b4] sm:$0xf]
      %v1167 = vld [vmem:[%s3 + $0x1b8] sm:$0xf]
      %v1168 = vld [vmem:[%s3 + $0x1bc] sm:$0xf]
      %v1169 = vld [vmem:[%s219 + $0x6] sm:$0xff]
      %v1170 = vld [vmem:[%s219 + $0xe] sm:$0xff]
      %v1171 = vld [vmem:[%s4] sm:$0x1]
      %v1173 = vlaneseq
      %v1174 = vshrl.u32 %v1173, 7
      %v1175 = vsub.s32 0, %v1174
      %v1176 = vrot.slane %v1171, %v1175
      %v1290 = vunpack.c.l.b16 %v1057
      %v1291 = vunpack.c.l.b16 %v1058
      %v1292 = vunpack.c.l.b16 %v1059
      %v1293 = vunpack.c.l.b16 %v1060
      %v1294 = vunpack.c.l.b16 %v1061
      %v1295 = vunpack.c.l.b16 %v1062
      %v1296 = vunpack.c.l.b16 %v1063
      %v1297 = vunpack.c.l.b16 %v1064
      %v1298 = vunpack.c.l.b16 %v1065
      %v1299 = vunpack.c.l.b16 %v1066
      %v1300 = vunpack.c.l.b16 %v1067
      %v1301 = vunpack.c.l.b16 %v1068
      %v1302 = vunpack.c.l.b16 %v1069
      %v1303 = vunpack.c.l.b16 %v1070
      %v1304 = vunpack.c.l.b16 %v1071
      %v1305 = vunpack.c.l.b16 %v1072
      %v1306 = vunpack.c.l.b16 %v1073
      %v1307 = vunpack.c.l.b16 %v1074
      %v1308 = vunpack.c.l.b16 %v1075
      %v1309 = vunpack.c.l.b16 %v1076
      %v1310 = vunpack.c.l.b16 %v1077
      %v1311 = vunpack.c.l.b16 %v1078
      %v1312 = vunpack.c.l.b16 %v1079
      %v1313 = vunpack.c.l.b16 %v1080
      %v1314 = vunpack.c.l.b16 %v1081
      %v1315 = vunpack.c.l.b16 %v1082
      %v1316 = vunpack.c.l.b16 %v1083
      %v1317 = vunpack.c.l.b16 %v1084
      %v1318 = vunpack.c.l.b16 %v1085
      %v1319 = vunpack.c.l.b16 %v1086
      %v1320 = vunpack.c.l.b16 %v1087
      %v1321 = vunpack.c.l.b16 %v1088
      %v1322 = vunpack.c.l.b16 %v1089
      %v1323 = vunpack.c.l.b16 %v1090
      %v1324 = vunpack.c.l.b16 %v1091
      %v1325 = vunpack.c.l.b16 %v1092
      %v1326 = vunpack.c.l.b16 %v1093
      %v1327 = vunpack.c.l.b16 %v1094
      %v1328 = vunpack.c.l.b16 %v1095
      %v1329 = vunpack.c.l.b16 %v1096
      %v1330 = vunpack.c.l.b16 %v1097
      %v1331 = vunpack.c.l.b16 %v1098
      %v1332 = vunpack.c.l.b16 %v1099
      %v1333 = vunpack.c.l.b16 %v1100
      %v1334 = vunpack.c.l.b16 %v1101
      %v1335 = vunpack.c.l.b16 %v1102
      %v1336 = vunpack.c.l.b16 %v1103
      %v1337 = vunpack.c.l.b16 %v1104
      %v1338 = vunpack.c.l.b16 %v1105
      %v1339 = vunpack.c.l.b16 %v1106
      %v1340 = vunpack.c.l.b16 %v1107
      %v1341 = vunpack.c.l.b16 %v1108
      %v1342 = vunpack.c.l.b16 %v1109
      %v1343 = vunpack.c.l.b16 %v1110
      %v1344 = vunpack.c.l.b16 %v1111
      %v1345 = vunpack.c.l.b16 %v1112
      %v1346 = vunpack.c.l.b16 %v1113
      %v1347 = vunpack.c.l.b16 %v1114
      %v1348 = vunpack.c.l.b16 %v1115
      %v1349 = vunpack.c.l.b16 %v1116
      %v1350 = vunpack.c.l.b16 %v1117
      %v1351 = vunpack.c.l.b16 %v1118
      %v1352 = vunpack.c.l.b16 %v1119
      %v1353 = vunpack.c.l.b16 %v1120
      %v1354 = vunpack.c.l.b16 %v1121
      %v1355 = vunpack.c.l.b16 %v1122
      %v1356 = vunpack.c.l.b16 %v1123
      %v1357 = vunpack.c.l.b16 %v1124
      %v1358 = vunpack.c.l.b16 %v1125
      %v1359 = vunpack.c.l.b16 %v1126
      %v1360 = vunpack.c.l.b16 %v1127
      %v1361 = vunpack.c.l.b16 %v1128
      %v1362 = vunpack.c.l.b16 %v1129
      %v1363 = vunpack.c.l.b16 %v1130
      %v1364 = vunpack.c.l.b16 %v1131
      %v1365 = vunpack.c.l.b16 %v1132
      %v1366 = vunpack.c.l.b16 %v1133
      %v1367 = vunpack.c.l.b16 %v1134
      %v1368 = vunpack.c.l.b16 %v1135
      %v1369 = vunpack.c.l.b16 %v1136
      %v1370 = vunpack.c.l.b16 %v1137
      %v1371 = vunpack.c.l.b16 %v1138
      %v1372 = vunpack.c.l.b16 %v1139
      %v1373 = vunpack.c.l.b16 %v1140
      %v1374 = vunpack.c.l.b16 %v1141
      %v1375 = vunpack.c.l.b16 %v1142
      %v1376 = vunpack.c.l.b16 %v1143
      %v1377 = vunpack.c.l.b16 %v1144
      %v1378 = vunpack.c.l.b16 %v1145
      %v1379 = vunpack.c.l.b16 %v1146
      %v1380 = vunpack.c.l.b16 %v1147
      %v1381 = vunpack.c.l.b16 %v1148
      %v1382 = vunpack.c.l.b16 %v1149
      %v1383 = vunpack.c.l.b16 %v1150
      %v1384 = vunpack.c.l.b16 %v1151
      %v1385 = vunpack.c.l.b16 %v1152
      %v1386 = vunpack.c.l.b16 %v1153
      %v1387 = vunpack.c.l.b16 %v1154
      %v1388 = vunpack.c.l.b16 %v1155
      %v1389 = vunpack.c.l.b16 %v1156
      %v1390 = vunpack.c.l.b16 %v1157
      %v1391 = vunpack.c.l.b16 %v1158
      %v1392 = vunpack.c.l.b16 %v1159
      %v1393 = vunpack.c.l.b16 %v1160
      %v1394 = vunpack.c.l.b16 %v1161
      %v1395 = vunpack.c.l.b16 %v1162
      %v1396 = vunpack.c.l.b16 %v1163
      %v1397 = vunpack.c.l.b16 %v1164
      %v1398 = vunpack.c.l.b16 %v1165
      %v1399 = vunpack.c.l.b16 %v1166
      %v1400 = vunpack.c.l.b16 %v1167
      %v1401 = vunpack.c.l.b16 %v1168
      %v1402 = vpack.c.b16 %v1291, %v1290
      %v1403 = vpack.c.b16 %v1293, %v1292
      %v1404 = vpack.c.b16 %v1295, %v1294
      %v1405 = vpack.c.b16 %v1297, %v1296
      %v1406 = vpack.c.b16 %v1299, %v1298
      %v1407 = vpack.c.b16 %v1301, %v1300
      %v1408 = vpack.c.b16 %v1303, %v1302
      %v1409 = vpack.c.b16 %v1305, %v1304
      %v1410 = vpack.c.b16 %v1307, %v1306
      %v1411 = vpack.c.b16 %v1309, %v1308
      %v1412 = vpack.c.b16 %v1311, %v1310
      %v1413 = vpack.c.b16 %v1313, %v1312
      %v1414 = vpack.c.b16 %v1315, %v1314
      %v1415 = vpack.c.b16 %v1317, %v1316
      %v1416 = vpack.c.b16 %v1319, %v1318
      %v1417 = vpack.c.b16 %v1321, %v1320
      %v1418 = vpack.c.b16 %v1323, %v1322
      %v1419 = vpack.c.b16 %v1325, %v1324
      %v1420 = vpack.c.b16 %v1327, %v1326
      %v1421 = vpack.c.b16 %v1329, %v1328
      %v1422 = vpack.c.b16 %v1331, %v1330
      %v1423 = vpack.c.b16 %v1333, %v1332
      %v1424 = vpack.c.b16 %v1335, %v1334
      %v1425 = vpack.c.b16 %v1337, %v1336
      %v1426 = vpack.c.b16 %v1339, %v1338
      %v1427 = vpack.c.b16 %v1341, %v1340
      %v1428 = vpack.c.b16 %v1343, %v1342
      %v1429 = vpack.c.b16 %v1345, %v1344
      %v1430 = vpack.c.b16 %v1347, %v1346
      %v1431 = vpack.c.b16 %v1349, %v1348
      %v1432 = vpack.c.b16 %v1351, %v1350
      %v1433 = vpack.c.b16 %v1353, %v1352
      %v1434 = vpack.c.b16 %v1355, %v1354
      %v1435 = vpack.c.b16 %v1357, %v1356
      %v1436 = vpack.c.b16 %v1359, %v1358
      %v1437 = vpack.c.b16 %v1361, %v1360
      %v1438 = vpack.c.b16 %v1363, %v1362
      %v1439 = vpack.c.b16 %v1365, %v1364
      %v1440 = vpack.c.b16 %v1367, %v1366
      %v1441 = vpack.c.b16 %v1369, %v1368
      %v1442 = vpack.c.b16 %v1371, %v1370
      %v1443 = vpack.c.b16 %v1373, %v1372
      %v1444 = vpack.c.b16 %v1375, %v1374
      %v1445 = vpack.c.b16 %v1377, %v1376
      %v1446 = vpack.c.b16 %v1379, %v1378
      %v1447 = vpack.c.b16 %v1381, %v1380
      %v1448 = vpack.c.b16 %v1383, %v1382
      %v1449 = vpack.c.b16 %v1385, %v1384
      %v1450 = vpack.c.b16 %v1387, %v1386
      %v1451 = vpack.c.b16 %v1389, %v1388
      %v1452 = vpack.c.b16 %v1391, %v1390
      %v1453 = vpack.c.b16 %v1393, %v1392
      %v1454 = vpack.c.b16 %v1395, %v1394
      %v1455 = vpack.c.b16 %v1397, %v1396
      %v1456 = vpack.c.b16 %v1399, %v1398
      %v1457 = vpack.c.b16 %v1401, %v1400
      %1514 = vmatprep.subr.bf16.mxu0 0
      %1515 = vmatpush1.bf16.msra.mxu0 %v1409
      %1516 = vmatprep.subr.bf16.mxu0 0
      %1517 = vmatpush1.bf16.msra.mxu0 %v1408
      %1518 = vmatprep.subr.bf16.mxu0 0
      %1519 = vmatpush1.bf16.msra.mxu0 %v1407
      %1520 = vmatprep.subr.bf16.mxu0 0
      %1521 = vmatpush1.bf16.msra.mxu0 %v1406
      %1522 = vmatprep.subr.bf16.mxu0 0
      %1523 = vmatpush1.bf16.msra.mxu0 %v1405
      %1524 = vmatprep.subr.bf16.mxu0 0
      %1525 = vmatpush1.bf16.msra.mxu0 %v1404
      %1526 = vmatprep.subr.bf16.mxu0 0
      %1527 = vmatpush1.bf16.msra.mxu0 %v1403
      %1528 = vmatprep.subr.bf16.mxu0 0
      %1529 = vmatpush1.bf16.msra.mxu0 %v1402
      %1530 = vmatprep.subr.bf16.mxu0 0
      %1531 = vmatpush2.bf16.msra.mxu0 %v1417
      %1532 = vmatprep.subr.bf16.mxu0 0
      %1533 = vmatpush2.bf16.msra.mxu0 %v1416
      %1534 = vmatprep.subr.bf16.mxu0 0
      %1535 = vmatpush2.bf16.msra.mxu0 %v1415
      %1536 = vmatprep.subr.bf16.mxu0 0
      %1537 = vmatpush2.bf16.msra.mxu0 %v1414
      %1538 = vmatprep.subr.bf16.mxu0 0
      %1539 = vmatpush2.bf16.msra.mxu0 %v1413
      %1540 = vmatprep.subr.bf16.mxu0 0
      %1541 = vmatpush2.bf16.msra.mxu0 %v1412
      %1542 = vmatprep.subr.bf16.mxu0 0
      %1543 = vmatpush2.bf16.msra.mxu0 %v1411
      %1544 = vmatprep.subr.bf16.mxu0 0
      %1545 = vmatpush2.bf16.msra.mxu0 %v1410
      %1546 = vmatprep.mubr.bf16.mxu0 %v1023
      %1547 = vmatmul.mubr.bf16.gmra.mxu0 %v1010
      %v1548 = vpop.f32.mrf.mxu0
      %v1549 = vadd.f32 %v1176, %v1548
      %v1550 = vpop.f32.mrf.mxu0
      %v1551 = vpop.f32.mrf.mxu0
      %v1552 = vadd.f32 %v1176, %v1551
      %v1553 = vpop.f32.mrf.mxu0
      %1554 = vdwg.mxu0
      %1555 = vmatprep.subr.bf16.mxu0 0
      %1556 = vmatpush1.bf16.msra.mxu0 %v1425
      %1557 = vmatprep.subr.bf16.mxu0 0
      %1558 = vmatpush1.bf16.msra.mxu0 %v1424
      %1559 = vmatprep.subr.bf16.mxu0 0
      %1560 = vmatpush1.bf16.msra.mxu0 %v1423
      %1561 = vmatprep.subr.bf16.mxu0 0
      %1562 = vmatpush1.bf16.msra.mxu0 %v1422
      %1563 = vmatprep.subr.bf16.mxu0 0
      %1564 = vmatpush1.bf16.msra.mxu0 %v1421
      %1565 = vmatprep.subr.bf16.mxu0 0
      %1566 = vmatpush1.bf16.msra.mxu0 %v1420
      %1567 = vmatprep.subr.bf16.mxu0 0
      %1568 = vmatpush1.bf16.msra.mxu0 %v1419
      %1569 = vmatprep.subr.bf16.mxu0 0
      %1570 = vmatpush1.bf16.msra.mxu0 %v1418
      %1571 = vmatprep.subr.bf16.mxu0 0
      %1572 = vmatpush2.bf16.msra.mxu0 %v1433
      %1573 = vmatprep.subr.bf16.mxu0 0
      %1574 = vmatpush2.bf16.msra.mxu0 %v1432
      %1575 = vmatprep.subr.bf16.mxu0 0
      %1576 = vmatpush2.bf16.msra.mxu0 %v1431
      %1577 = vmatprep.subr.bf16.mxu0 0
      %1578 = vmatpush2.bf16.msra.mxu0 %v1430
      %1579 = vmatprep.subr.bf16.mxu0 0
      %1580 = vmatpush2.bf16.msra.mxu0 %v1429
      %1581 = vmatprep.subr.bf16.mxu0 0
      %1582 = vmatpush2.bf16.msra.mxu0 %v1428
      %1583 = vmatprep.subr.bf16.mxu0 0
      %1584 = vmatpush2.bf16.msra.mxu0 %v1427
      %1585 = vmatprep.subr.bf16.mxu0 0
      %1586 = vmatpush2.bf16.msra.mxu0 %v1426
      %1587 = vmatprep.mubr.bf16.mxu0 %v1039
      %1588 = vmatmul.mubr.bf16.gmra.mxu0 %v1029
      %v1589 = vpop.f32.mrf.mxu0
      %v1590 = vadd.f32 %v1549, %v1589
      %v1591 = vpop.f32.mrf.mxu0
      %v1592 = vpop.f32.mrf.mxu0
      %v1593 = vadd.f32 %v1552, %v1592
      %v1594 = vpop.f32.mrf.mxu0
      %1595 = vdwg.mxu0
      %1596 = vmatprep.subr.bf16.mxu0 0
      %1597 = vmatpush1.bf16.msra.mxu0 %v1441
      %1598 = vmatprep.subr.bf16.mxu0 0
      %1599 = vmatpush1.bf16.msra.mxu0 %v1440
      %1600 = vmatprep.subr.bf16.mxu0 0
      %1601 = vmatpush1.bf16.msra.mxu0 %v1439
      %1602 = vmatprep.subr.bf16.mxu0 0
      %1603 = vmatpush1.bf16.msra.mxu0 %v1438
      %1604 = vmatprep.subr.bf16.mxu0 0
      %1605 = vmatpush1.bf16.msra.mxu0 %v1437
      %1606 = vmatprep.subr.bf16.mxu0 0
      %1607 = vmatpush1.bf16.msra.mxu0 %v1436
      %1608 = vmatprep.subr.bf16.mxu0 0
      %1609 = vmatpush1.bf16.msra.mxu0 %v1435
      %1610 = vmatprep.subr.bf16.mxu0 0
      %1611 = vmatpush1.bf16.msra.mxu0 %v1434
      %1612 = vmatprep.subr.bf16.mxu0 0
      %1613 = vmatpush2.bf16.msra.mxu0 %v1449
      %1614 = vmatprep.subr.bf16.mxu0 0
      %1615 = vmatpush2.bf16.msra.mxu0 %v1448
      %1616 = vmatprep.subr.bf16.mxu0 0
      %1617 = vmatpush2.bf16.msra.mxu0 %v1447
      %1618 = vmatprep.subr.bf16.mxu0 0
      %1619 = vmatpush2.bf16.msra.mxu0 %v1446
      %1620 = vmatprep.subr.bf16.mxu0 0
      %1621 = vmatpush2.bf16.msra.mxu0 %v1445
      %1622 = vmatprep.subr.bf16.mxu0 0
      %1623 = vmatpush2.bf16.msra.mxu0 %v1444
      %1624 = vmatprep.subr.bf16.mxu0 0
      %1625 = vmatpush2.bf16.msra.mxu0 %v1443
      %1626 = vmatprep.subr.bf16.mxu0 0
      %1627 = vmatpush2.bf16.msra.mxu0 %v1442
      %1628 = vmatprep.mubr.bf16.mxu0 %v1051
      %1629 = vmatmul.mubr.bf16.gmra.mxu0 %v1043
      %v1630 = vpop.f32.mrf.mxu0
      %v1631 = vadd.f32 %v1590, %v1630
      %v1632 = vpop.f32.mrf.mxu0
      %v1633 = vpop.f32.mrf.mxu0
      %v1634 = vadd.f32 %v1593, %v1633
      %v1635 = vpop.f32.mrf.mxu0
      %1636 = vdwg.mxu0
      %1637 = vmatprep.subr.bf16.mxu0 0
      %1638 = vmatpush1.bf16.msra.mxu0 %v1457
      %1639 = vmatprep.subr.bf16.mxu0 0
      %1640 = vmatpush1.bf16.msra.mxu0 %v1456
      %1641 = vmatprep.subr.bf16.mxu0 0
      %1642 = vmatpush1.bf16.msra.mxu0 %v1455
      %1643 = vmatprep.subr.bf16.mxu0 0
      %1644 = vmatpush1.bf16.msra.mxu0 %v1454
      %1645 = vmatprep.subr.bf16.mxu0 0
      %1646 = vmatpush1.bf16.msra.mxu0 %v1453
      %1647 = vmatprep.subr.bf16.mxu0 0
      %1648 = vmatpush1.bf16.msra.mxu0 %v1452
      %1649 = vmatprep.subr.bf16.mxu0 0
      %1650 = vmatpush1.bf16.msra.mxu0 %v1451
      %1651 = vmatprep.subr.bf16.mxu0 0
      %1652 = vmatpush1.bf16.msra.mxu0 %v1450
      %1653 = vmatprep.subr.bf16.mxu0 0
      %1654 = vmatpush2.bf16.msra.mxu0 0
      %1655 = vmatprep.subr.bf16.mxu0 0
      %1656 = vmatpush2.bf16.msra.mxu0 0
      %1657 = vmatprep.subr.bf16.mxu0 0
      %1658 = vmatpush2.bf16.msra.mxu0 0
      %1659 = vmatprep.subr.bf16.mxu0 0
      %1660 = vmatpush2.bf16.msra.mxu0 0
      %1661 = vmatprep.subr.bf16.mxu0 0
      %1662 = vmatpush2.bf16.msra.mxu0 0
      %1663 = vmatprep.subr.bf16.mxu0 0
      %1664 = vmatpush2.bf16.msra.mxu0 0
      %1665 = vmatprep.subr.bf16.mxu0 0
      %1666 = vmatpush2.bf16.msra.mxu0 0
      %1667 = vmatprep.subr.bf16.mxu0 0
      %1668 = vmatpush2.bf16.msra.mxu0 0
      %1669 = vmatprep.mubr.bf16.mxu0 0
      %1670 = vmatmul.mubr.bf16.gmra.mxu0 %v1055
      %v1671 = vpop.f32.mrf.mxu0
      %v1672 = vadd.f32 %v1631, %v1671
      %v1673 = vpop.f32.mrf.mxu0
      %v1674 = vpop.f32.mrf.mxu0
      %v1675 = vadd.f32 %v1634, %v1674
      %v1676 = vpop.f32.mrf.mxu0
      %1677 = vdwg.mxu0
      %v1678 = vadd.f32 %v1672, %v1169
      %v1679 = vadd.f32 %v1675, %v1170
      %v1680 = vmax.f32 %v1678, 0.0
      %v1681 = vmax.f32 %v1679, 0.0
      %1682 = vst [vmem:[%s224] sm:$0xff] %v1680
      %1683 = vst [vmem:[%s224 + $0x8] sm:$0xff] %v1681
      %p1684 = scmp.lt.s32.totalorder %s16, 1
      %s1685 = scalar_select %p1684, %s16, 1
      %s1686 = smul.addr %s1685, 3
      %s1687 = smul.addr %s1686, 8
      %s1688 = scalar_lea.vmem %s5, %s1687
      // Predicated region
      $region41: #{spatial_residual_block.1} parent=39 // pred_check
        %p1689 = pneg %p144
      $region42: #{spatial_residual_block.1} parent=39 // pred_check_branch
        %1691 = sbr.rel (%p1689) target = $region44
      $region43: #{spatial_residual_block.1} parent=39 // pred_region
        _
      $region44: #{spatial_residual_block.1} parent=39 // pred_fallthru
        _
    $region40: #{spatial_residual_block.1} parent=5 // pred_fallthru
      _
    %p1692 = scmp.le.s32.totalorder 2, %s11
    // Predicated region
    $region45: #{spatial_residual_block.1} parent=5 // pred_check
      %p1693 = pneg %p1692
    $region46: #{spatial_residual_block.1} parent=5 // pred_check_branch
      %1695 = sbr.rel (%p1693) target = $region48
    $region47: #{spatial_residual_block.1} parent=5 // pred_region
      %s1696 = ssub.s32 %s11, 2
      // Predicated region
      $region49: #{spatial_residual_block.1} parent=47 // pred_check
        %p1697 = pneg %p150
      $region50: #{spatial_residual_block.1} parent=47 // pred_check_branch
        %1699 = sbr.rel (%p1697) target = $region52
      $region51: #{spatial_residual_block.1} parent=47 // pred_region
        %p1700 = scmp.lt.s32.totalorder %s17, 1
        %s1701 = scalar_select %p1700, %s17, 1
        %s1702 = smul.addr %s1701, 3
        %s1703 = smul.addr %s1702, 8
        %s1704 = scalar_lea.vmem %s5, %s1703
      $region52: #{spatial_residual_block.1} parent=47 // pred_fallthru
        _
    $region48: #{spatial_residual_block.1} parent=5 // pred_fallthru
      _
  $region6: #{spatial_residual_block.1} parent=0 // loop_footer
    %s15 = sadd.s32 1, %s11
  $region7: #{spatial_residual_block.1} parent=0 // loop_footer_branch
    %10 = sbr.rel target = $region3
  $region8: #{spatial_residual_block.1} parent=0 // loop_exit
    _

</llo_original>
